<compile_context>
chip_gen: v6e
topology: v6e:2x2x1
jax: 0.10.0
libtpu: 0.0.40
codegen_flags: <defaults>
</compile_context>

<pallas_src>
import jax
import jax.numpy as jnp
from jax.experimental import pallas as pl
from jax.experimental.pallas import tpu as pltpu


# ----------------------------- Pallas kernel --------------------------------
def _encoder_prediction_kernel(
    x_ref,       # (L*B, 2)      dxdy flattened over (time, batch), f32
    h0_ref,      # (B, H)        initial hidden state, f32
    c0_ref,      # (B, H)        initial cell state, f32
    wcomb_ref,   # (3, 4H)       rows 0-1: fused Wemb@Wih (gate-permuted); row 2: fused bias
    whh_ref,     # (H, 4H)       LSTM weight_hh (transposed, gate-permuted), bf16
    cls_ref,     # (2H+8, 128)   [0:H)=W1 pad, row H=b1, row H+1=b2, [H+8:2H+8)=W2 pad
    out_ref,     # (B, 128)      lane-dense output; column 0 is the real score
    xproj_s,     # scratch (L*B, 4H) f32: hoisted input projections for all steps
):
    B, H = h0_ref.shape
    L = x_ref.shape[0] // B
    H3 = 3 * H

    # ---- fused spatial_embedding + LSTM input projection, ALL timesteps at once.
    # K=2, so two VPU broadcast FMAs instead of MXU matmuls.
    x = x_ref[...]
    xproj_s[...] = (x[:, 0:1] * wcomb_ref[0:1, :]
                    + x[:, 1:2] * wcomb_ref[1:2, :]
                    + wcomb_ref[2:3, :])

    # ---- serial LSTM recurrence, gate layout (i, f, o, g), statically unrolled.
    h = h0_ref[...]
    c = c0_ref[...]
    for t in range(L):  # L static -> static 8-aligned slices, fully unrolled
        # bf16 MXU operands, f32 accumulation; whh_ref read inside the loop
        # (not hoisted) so it is not held live across the unrolled steps.
        gates = xproj_s[t * B:(t + 1) * B, :] + jnp.dot(
            h.astype(jnp.bfloat16), whh_ref[...],
            preferred_element_type=jnp.float32)
        # sigmoid(x) == 0.5*tanh(0.5*x)+0.5 : one EUP slab for i, f, o together
        sig = 0.5 * jnp.tanh(0.5 * gates[:, :H3]) + 0.5
        g_g = jnp.tanh(gates[:, H3:])
        c = sig[:, H:2 * H] * c + sig[:, 0:H] * g_g      # f*c + i*g
        h = sig[:, 2 * H:H3] * jnp.tanh(c)               # o*tanh(c)

    # ---- real_classifier on the final hidden state (one-time, kept in f32)
    w1 = cls_ref[0:H, :]
    b1 = cls_ref[H:H + 1, :]
    b2 = cls_ref[H + 1:H + 2, :]
    w2 = cls_ref[H + 8:2 * H + 8, :]
    z1 = jnp.dot(h, w1, preferred_element_type=jnp.float32) + b1
    z1 = jnp.where(z1 > 0, z1, 0.01 * z1)   # LeakyReLU(0.01)
    # lane-dense (B, 128) store; only lane 0 carries the score
    out_ref[...] = jnp.dot(z1, w2, preferred_element_type=jnp.float32) + b2


# ------------------------- one-time parameter packing ------------------------
def prepare_params(params):
    """Fusion / permutation / padding / bf16 cast done ONCE, not per call."""
    H = params["whh_t"].shape[0]
    M = params["w1_t"].shape[1]

    # permute gate columns (i, f, g, o) -> (i, f, o, g): contiguous sigmoid slab
    perm = jnp.concatenate([jnp.arange(0, 2 * H),
                            jnp.arange(3 * H, 4 * H),
                            jnp.arange(2 * H, 3 * H)])
    wih_p = params["wih_t"][:, perm]                     # (E, 4H)
    whh_p = params["whh_t"][:, perm]                     # (H, 4H)
    b_p = params["blstm"][:, perm]                       # (1, 4H)

    # fuse spatial_embedding Linear(2, E) into the LSTM input projection
    w_comb = params["wemb_t"] @ wih_p                    # (2, 4H)
    b_comb = params["bemb"] @ wih_p + b_p                # (1, 4H)
    wcomb = jnp.concatenate([w_comb, b_comb], axis=0)    # (3, 4H)

    # classifier packed into one lane-dense slab with 8-aligned row offsets:
    #   rows [0, H)      : W1^T zero-padded to 128 lanes
    #   row  H           : b1  (padded)
    #   row  H+1         : b2  (score bias in lane 0)
    #   rows [H+8, 2H+8) : W2^T zero-padded to (128, 128), score column = lane 0
    w1_pad = jnp.zeros((H, 128), jnp.float32).at[:, :M].set(params["w1_t"])
    bias_block = jnp.zeros((8, 128), jnp.float32)
    bias_block = bias_block.at[0, :M].set(params["b1"][0])
    bias_block = bias_block.at[1, 0].set(params["b2"][0, 0])
    w2_pad = jnp.zeros((H, 128), jnp.float32).at[:M, 0:1].set(params["w2_t"])
    cls = jnp.concatenate([w1_pad, bias_block, w2_pad], axis=0)  # (2H+8, 128)

    return {
        "wcomb": wcomb,                                  # f32 (3, 4H)
        "whh_bf16": whh_p.astype(jnp.bfloat16),          # bf16 MXU operand
        "cls": cls,                                      # f32 (2H+8, 128)
    }


# ------------------------------- forward wrapper -----------------------------
def encoder_prediction_forward(dxdy, state_tuple, prep):
    """dxdy: (L, B, 2), state_tuple: (h0, c0) each (1, B, H). Returns (1, B, 1)."""
    L, B, _ = dxdy.shape
    h0, c0 = state_tuple
    H = h0.shape[-1]

    x_flat = dxdy.reshape(L * B, 2)  # layout plumbing only

    def full(shape):
        return pl.BlockSpec(shape, lambda i, _s=shape: (0,) * len(_s))

    out = pl.pallas_call(
        _encoder_prediction_kernel,
        out_shape=jax.ShapeDtypeStruct((B, 128), jnp.float32),
        grid=(1,),  # single invocation; whole recurrence runs in-kernel
        in_specs=[
            full((L * B, 2)),          # dxdy (all timesteps)
            full((B, H)),              # h0
            full((B, H)),              # c0
            full((3, 4 * H)),          # fused input-projection slab
            full((H, 4 * H)),          # W_hh^T (bf16, gate-permuted)
            full((2 * H + 8, 128)),    # packed classifier slab
        ],
        out_specs=pl.BlockSpec((B, 128), lambda i: (0, 0)),
        scratch_shapes=[
            pltpu.VMEM((L * B, 4 * H), jnp.float32),  # hoisted input projections
        ],
        compiler_params=pltpu.CompilerParams(
            dimension_semantics=("arbitrary",),
        ),
    )(x_flat, h0[0], c0[0], prep["wcomb"], prep["whh_bf16"], prep["cls"])
    return out[:, 0:1].reshape(1, B, 1)


# ------------------------- deterministic raw parameters ----------------------
def make_params(key, embedding_dim=64, hidden_dim=128, mlp_dim=32):
    ks = jax.random.split(key, 12)

    def unif(k, shape, fan_in):
        bound = 1.0 / jnp.sqrt(fan_in)
        return jax.random.uniform(k, shape, jnp.float32, -bound, bound)

    E, H, M = embedding_dim, hidden_dim, mlp_dim
    return {
        # spatial_embedding: Linear(2, E); stored transposed (2, E)
        "wemb_t": unif(ks[0], (2, E), 2),
        "bemb": unif(ks[1], (1, E), 2),
        # LSTM(E, H): weight_ih (4H, E), weight_hh (4H, H); stored transposed
        "wih_t": unif(ks[2], (E, 4 * H), H),
        "whh_t": unif(ks[3], (H, 4 * H), H),
        "blstm": unif(ks[4], (1, 4 * H), H) + unif(ks[5], (1, 4 * H), H),
        # real_classifier: Linear(H, M) + LeakyReLU + Linear(M, 1)
        "w1_t": unif(ks[6], (H, M), H),
        "b1": unif(ks[7], (1, M), H),
        "w2_t": unif(ks[8], (M, 1), M),
        "b2": unif(ks[9], (1, 1), M),
    }


# ------------------------------ pure-JAX reference ---------------------------
def reference_forward(dxdy, state_tuple, params):
    L, B, _ = dxdy.shape
    h, c = state_tuple[0][0], state_tuple[1][0]
    emb = dxdy @ params["wemb_t"] + params["bemb"]  # (L, B, E)
    H = h.shape[-1]
    for t in range(L):
        gates = emb[t] @ params["wih_t"] + h @ params["whh_t"] + params["blstm"]
        i_g = jax.nn.sigmoid(gates[:, 0 * H:1 * H])
        f_g = jax.nn.sigmoid(gates[:, 1 * H:2 * H])
        g_g = jnp.tanh(gates[:, 2 * H:3 * H])
        o_g = jax.nn.sigmoid(gates[:, 3 * H:4 * H])
        c = f_g * c + i_g * g_g
        h = o_g * jnp.tanh(c)
    z1 = h @ params["w1_t"] + params["b1"]
    z1 = jnp.where(z1 > 0, z1, 0.01 * z1)
    score = z1 @ params["w2_t"] + params["b2"]
    return score.reshape(1, B, 1)


if __name__ == "__main__":
    L, B, H = 8, 8, 128   # seq=8, batch=8, encoder_h_dim_d=128 (module default)
    key = jax.random.PRNGKey(0)
    k_p, k_x = jax.random.split(key)

    params = make_params(k_p)
    prep = prepare_params(params)   # one-time packing (not on the per-call path)

    dxdy = jax.random.normal(k_x, (L, B, 2), jnp.float32)
    state_tuple = (
        jnp.zeros((1, B, H), jnp.float32),
        jnp.zeros((1, B, H), jnp.float32),
    )

    score = encoder_prediction_forward(dxdy, state_tuple, prep)
    score = jax.block_until_ready(score)

    ref = reference_forward(dxdy, state_tuple, params)
    assert score.shape == (1, B, 1)
    err = jnp.max(jnp.abs(score - ref))
    # bf16 MXU operands on the recurrence (f32 accumulation / f32 state & gate
    # math) shift parity from ~5e-4 to the low 1e-3 range; 5e-3 bounds it.
    assert jnp.allclose(score, ref, atol=5e-3, rtol=5e-3), f"mismatch: max err {err}"

    print("KERNEL_OK")
</pallas_src>

<mosaic_0001>
module attributes {stable_mosaic.version = 11 : i64} {
  func.func @_encoder_prediction_kernel(%arg0: i32, %arg1: memref<64x2xf32, #tpu.memory_space<vmem>>, %arg2: memref<8x128xf32, #tpu.memory_space<vmem>>, %arg3: memref<8x128xf32, #tpu.memory_space<vmem>>, %arg4: memref<3x512xf32, #tpu.memory_space<vmem>>, %arg5: memref<128x512xbf16, #tpu.memory_space<vmem>>, %arg6: memref<264x128xf32, #tpu.memory_space<vmem>>, %arg7: memref<8x128xf32, #tpu.memory_space<vmem>>, %arg8: memref<64x512xf32, #tpu.memory_space<vmem>>) attributes {dimension_semantics = [#tpu.dimension_semantics<arbitrary>], iteration_bounds = array<i64: 1>, scalar_prefetch = 0 : i64, scratch_operands = 1 : i64, tpu.core_type = #tpu.core_type<tc>, window_params = [{pipeline_mode = #tpu.pipeline_mode<synchronous>, transform_indices = @transform_0, window_bounds = array<i64: 64, 2>}, {pipeline_mode = #tpu.pipeline_mode<synchronous>, transform_indices = @transform_1, window_bounds = array<i64: 8, 128>}, {pipeline_mode = #tpu.pipeline_mode<synchronous>, transform_indices = @transform_2, window_bounds = array<i64: 8, 128>}, {pipeline_mode = #tpu.pipeline_mode<synchronous>, transform_indices = @transform_3, window_bounds = array<i64: 3, 512>}, {pipeline_mode = #tpu.pipeline_mode<synchronous>, transform_indices = @transform_4, window_bounds = array<i64: 128, 512>}, {pipeline_mode = #tpu.pipeline_mode<synchronous>, transform_indices = @transform_5, window_bounds = array<i64: 264, 128>}, {pipeline_mode = #tpu.pipeline_mode<synchronous>, transform_indices = @transform_6, window_bounds = array<i64: 8, 128>}]} {
    %c0 = arith.constant 0 : index
    %c0_0 = arith.constant 0 : index
    %0 = vector.load %arg1[%c0, %c0_0] : memref<64x2xf32, #tpu.memory_space<vmem>>, vector<64x2xf32>
    %1 = vector.extract_strided_slice %0 {offsets = [0, 0], sizes = [64, 1], strides = [1, 1]} : vector<64x2xf32> to vector<64x1xf32>
    %c0_1 = arith.constant 0 : index
    %c0_2 = arith.constant 0 : index
    %2 = vector.load %arg4[%c0_1, %c0_2] : memref<3x512xf32, #tpu.memory_space<vmem>>, vector<1x512xf32>
    %3 = vector.broadcast %1 : vector<64x1xf32> to vector<64x512xf32>
    %4 = vector.broadcast %2 : vector<1x512xf32> to vector<64x512xf32>
    %5 = arith.mulf %3, %4 : vector<64x512xf32>
    %6 = vector.extract_strided_slice %0 {offsets = [0, 1], sizes = [64, 1], strides = [1, 1]} : vector<64x2xf32> to vector<64x1xf32>
    %c1 = arith.constant 1 : index
    %c0_3 = arith.constant 0 : index
    %7 = vector.load %arg4[%c1, %c0_3] : memref<3x512xf32, #tpu.memory_space<vmem>>, vector<1x512xf32>
    %8 = vector.broadcast %6 : vector<64x1xf32> to vector<64x512xf32>
    %9 = vector.broadcast %7 : vector<1x512xf32> to vector<64x512xf32>
    %10 = arith.mulf %8, %9 : vector<64x512xf32>
    %11 = arith.addf %5, %10 : vector<64x512xf32>
    %c2 = arith.constant 2 : index
    %c0_4 = arith.constant 0 : index
    %12 = vector.load %arg4[%c2, %c0_4] : memref<3x512xf32, #tpu.memory_space<vmem>>, vector<1x512xf32>
    %13 = vector.broadcast %12 : vector<1x512xf32> to vector<64x512xf32>
    %14 = arith.addf %11, %13 : vector<64x512xf32>
    %c0_5 = arith.constant 0 : index
    %c0_6 = arith.constant 0 : index
    %15 = vector.load %arg8[%c0_5, %c0_6] : memref<64x512xf32, #tpu.memory_space<vmem>>, vector<64x512xf32>
    tpu.vector_store %arg8[%c0_5, %c0_6], %14 {strides = array<i32>} : memref<64x512xf32, #tpu.memory_space<vmem>>, vector<64x512xf32>,
    %c0_7 = arith.constant 0 : index
    %c0_8 = arith.constant 0 : index
    %16 = vector.load %arg2[%c0_7, %c0_8] : memref<8x128xf32, #tpu.memory_space<vmem>>, vector<8x128xf32>
    %c0_9 = arith.constant 0 : index
    %c0_10 = arith.constant 0 : index
    %17 = vector.load %arg3[%c0_9, %c0_10] : memref<8x128xf32, #tpu.memory_space<vmem>>, vector<8x128xf32>
    %c0_11 = arith.constant 0 : index
    %c0_12 = arith.constant 0 : index
    %18 = vector.load %arg8[%c0_11, %c0_12] : memref<64x512xf32, #tpu.memory_space<vmem>>, vector<8x512xf32>
    %19 = arith.truncf %16 : vector<8x128xf32> to vector<8x128xbf16>
    %c0_13 = arith.constant 0 : index
    %c0_14 = arith.constant 0 : index
    %20 = vector.load %arg5[%c0_13, %c0_14] : memref<128x512xbf16, #tpu.memory_space<vmem>>, vector<128x512xbf16>
    %cst = arith.constant dense<0.000000e+00> : vector<8x512xf32>
    %21 = tpu.matmul %19, %20, %cst {dimension_numbers = #tpu.dot_dimension_numbers<[1], [0], [0], [1], [0, 0, 1, 1], [], []>} : vector<8x128xbf16>, vector<128x512xbf16>, vector<8x512xf32> -> vector<8x512xf32>
    %22 = arith.addf %18, %21 : vector<8x512xf32>
    %23 = vector.extract_strided_slice %22 {offsets = [0, 0], sizes = [8, 384], strides = [1, 1]} : vector<8x512xf32> to vector<8x384xf32>
    %cst_15 = arith.constant 5.000000e-01 : f32
    %24 = vector.broadcast %cst_15 : f32 to vector<8x384xf32>
    %25 = arith.mulf %24, %23 : vector<8x384xf32>
    %26 = math.tanh %25 : vector<8x384xf32>
    %cst_16 = arith.constant 5.000000e-01 : f32
    %27 = vector.broadcast %cst_16 : f32 to vector<8x384xf32>
    %28 = arith.mulf %27, %26 : vector<8x384xf32>
    %cst_17 = arith.constant 5.000000e-01 : f32
    %29 = vector.broadcast %cst_17 : f32 to vector<8x384xf32>
    %30 = arith.addf %28, %29 : vector<8x384xf32>
    %31 = vector.extract_strided_slice %22 {offsets = [0, 384], sizes = [8, 128], strides = [1, 1]} : vector<8x512xf32> to vector<8x128xf32>
    %32 = math.tanh %31 : vector<8x128xf32>
    %33 = vector.extract_strided_slice %30 {offsets = [0, 128], sizes = [8, 128], strides = [1, 1]} : vector<8x384xf32> to vector<8x128xf32>
    %34 = arith.mulf %33, %17 : vector<8x128xf32>
    %35 = vector.extract_strided_slice %30 {offsets = [0, 0], sizes = [8, 128], strides = [1, 1]} : vector<8x384xf32> to vector<8x128xf32>
    %36 = arith.mulf %35, %32 : vector<8x128xf32>
    %37 = arith.addf %34, %36 : vector<8x128xf32>
    %38 = vector.extract_strided_slice %30 {offsets = [0, 256], sizes = [8, 128], strides = [1, 1]} : vector<8x384xf32> to vector<8x128xf32>
    %39 = math.tanh %37 : vector<8x128xf32>
    %40 = arith.mulf %38, %39 : vector<8x128xf32>
    %c8 = arith.constant 8 : index
    %c0_18 = arith.constant 0 : index
    %41 = vector.load %arg8[%c8, %c0_18] : memref<64x512xf32, #tpu.memory_space<vmem>>, vector<8x512xf32>
    %42 = arith.truncf %40 : vector<8x128xf32> to vector<8x128xbf16>
    %c0_19 = arith.constant 0 : index
    %c0_20 = arith.constant 0 : index
    %43 = vector.load %arg5[%c0_19, %c0_20] : memref<128x512xbf16, #tpu.memory_space<vmem>>, vector<128x512xbf16>
    %cst_21 = arith.constant dense<0.000000e+00> : vector<8x512xf32>
    %44 = tpu.matmul %42, %43, %cst_21 {dimension_numbers = #tpu.dot_dimension_numbers<[1], [0], [0], [1], [0, 0, 1, 1], [], []>} : vector<8x128xbf16>, vector<128x512xbf16>, vector<8x512xf32> -> vector<8x512xf32>
    %45 = arith.addf %41, %44 : vector<8x512xf32>
    %46 = vector.extract_strided_slice %45 {offsets = [0, 0], sizes = [8, 384], strides = [1, 1]} : vector<8x512xf32> to vector<8x384xf32>
    %cst_22 = arith.constant 5.000000e-01 : f32
    %47 = vector.broadcast %cst_22 : f32 to vector<8x384xf32>
    %48 = arith.mulf %47, %46 : vector<8x384xf32>
    %49 = math.tanh %48 : vector<8x384xf32>
    %cst_23 = arith.constant 5.000000e-01 : f32
    %50 = vector.broadcast %cst_23 : f32 to vector<8x384xf32>
    %51 = arith.mulf %50, %49 : vector<8x384xf32>
    %cst_24 = arith.constant 5.000000e-01 : f32
    %52 = vector.broadcast %cst_24 : f32 to vector<8x384xf32>
    %53 = arith.addf %51, %52 : vector<8x384xf32>
    %54 = vector.extract_strided_slice %45 {offsets = [0, 384], sizes = [8, 128], strides = [1, 1]} : vector<8x512xf32> to vector<8x128xf32>
    %55 = math.tanh %54 : vector<8x128xf32>
    %56 = vector.extract_strided_slice %53 {offsets = [0, 128], sizes = [8, 128], strides = [1, 1]} : vector<8x384xf32> to vector<8x128xf32>
    %57 = arith.mulf %56, %37 : vector<8x128xf32>
    %58 = vector.extract_strided_slice %53 {offsets = [0, 0], sizes = [8, 128], strides = [1, 1]} : vector<8x384xf32> to vector<8x128xf32>
    %59 = arith.mulf %58, %55 : vector<8x128xf32>
    %60 = arith.addf %57, %59 : vector<8x128xf32>
    %61 = vector.extract_strided_slice %53 {offsets = [0, 256], sizes = [8, 128], strides = [1, 1]} : vector<8x384xf32> to vector<8x128xf32>
    %62 = math.tanh %60 : vector<8x128xf32>
    %63 = arith.mulf %61, %62 : vector<8x128xf32>
    %c16 = arith.constant 16 : index
    %c0_25 = arith.constant 0 : index
    %64 = vector.load %arg8[%c16, %c0_25] : memref<64x512xf32, #tpu.memory_space<vmem>>, vector<8x512xf32>
    %65 = arith.truncf %63 : vector<8x128xf32> to vector<8x128xbf16>
    %c0_26 = arith.constant 0 : index
    %c0_27 = arith.constant 0 : index
    %66 = vector.load %arg5[%c0_26, %c0_27] : memref<128x512xbf16, #tpu.memory_space<vmem>>, vector<128x512xbf16>
    %cst_28 = arith.constant dense<0.000000e+00> : vector<8x512xf32>
    %67 = tpu.matmul %65, %66, %cst_28 {dimension_numbers = #tpu.dot_dimension_numbers<[1], [0], [0], [1], [0, 0, 1, 1], [], []>} : vector<8x128xbf16>, vector<128x512xbf16>, vector<8x512xf32> -> vector<8x512xf32>
    %68 = arith.addf %64, %67 : vector<8x512xf32>
    %69 = vector.extract_strided_slice %68 {offsets = [0, 0], sizes = [8, 384], strides = [1, 1]} : vector<8x512xf32> to vector<8x384xf32>
    %cst_29 = arith.constant 5.000000e-01 : f32
    %70 = vector.broadcast %cst_29 : f32 to vector<8x384xf32>
    %71 = arith.mulf %70, %69 : vector<8x384xf32>
    %72 = math.tanh %71 : vector<8x384xf32>
    %cst_30 = arith.constant 5.000000e-01 : f32
    %73 = vector.broadcast %cst_30 : f32 to vector<8x384xf32>
    %74 = arith.mulf %73, %72 : vector<8x384xf32>
    %cst_31 = arith.constant 5.000000e-01 : f32
    %75 = vector.broadcast %cst_31 : f32 to vector<8x384xf32>
    %76 = arith.addf %74, %75 : vector<8x384xf32>
    %77 = vector.extract_strided_slice %68 {offsets = [0, 384], sizes = [8, 128], strides = [1, 1]} : vector<8x512xf32> to vector<8x128xf32>
    %78 = math.tanh %77 : vector<8x128xf32>
    %79 = vector.extract_strided_slice %76 {offsets = [0, 128], sizes = [8, 128], strides = [1, 1]} : vector<8x384xf32> to vector<8x128xf32>
    %80 = arith.mulf %79, %60 : vector<8x128xf32>
    %81 = vector.extract_strided_slice %76 {offsets = [0, 0], sizes = [8, 128], strides = [1, 1]} : vector<8x384xf32> to vector<8x128xf32>
    %82 = arith.mulf %81, %78 : vector<8x128xf32>
    %83 = arith.addf %80, %82 : vector<8x128xf32>
    %84 = vector.extract_strided_slice %76 {offsets = [0, 256], sizes = [8, 128], strides = [1, 1]} : vector<8x384xf32> to vector<8x128xf32>
    %85 = math.tanh %83 : vector<8x128xf32>
    %86 = arith.mulf %84, %85 : vector<8x128xf32>
    %c24 = arith.constant 24 : index
    %c0_32 = arith.constant 0 : index
    %87 = vector.load %arg8[%c24, %c0_32] : memref<64x512xf32, #tpu.memory_space<vmem>>, vector<8x512xf32>
    %88 = arith.truncf %86 : vector<8x128xf32> to vector<8x128xbf16>
    %c0_33 = arith.constant 0 : index
    %c0_34 = arith.constant 0 : index
    %89 = vector.load %arg5[%c0_33, %c0_34] : memref<128x512xbf16, #tpu.memory_space<vmem>>, vector<128x512xbf16>
    %cst_35 = arith.constant dense<0.000000e+00> : vector<8x512xf32>
    %90 = tpu.matmul %88, %89, %cst_35 {dimension_numbers = #tpu.dot_dimension_numbers<[1], [0], [0], [1], [0, 0, 1, 1], [], []>} : vector<8x128xbf16>, vector<128x512xbf16>, vector<8x512xf32> -> vector<8x512xf32>
    %91 = arith.addf %87, %90 : vector<8x512xf32>
    %92 = vector.extract_strided_slice %91 {offsets = [0, 0], sizes = [8, 384], strides = [1, 1]} : vector<8x512xf32> to vector<8x384xf32>
    %cst_36 = arith.constant 5.000000e-01 : f32
    %93 = vector.broadcast %cst_36 : f32 to vector<8x384xf32>
    %94 = arith.mulf %93, %92 : vector<8x384xf32>
    %95 = math.tanh %94 : vector<8x384xf32>
    %cst_37 = arith.constant 5.000000e-01 : f32
    %96 = vector.broadcast %cst_37 : f32 to vector<8x384xf32>
    %97 = arith.mulf %96, %95 : vector<8x384xf32>
    %cst_38 = arith.constant 5.000000e-01 : f32
    %98 = vector.broadcast %cst_38 : f32 to vector<8x384xf32>
    %99 = arith.addf %97, %98 : vector<8x384xf32>
    %100 = vector.extract_strided_slice %91 {offsets = [0, 384], sizes = [8, 128], strides = [1, 1]} : vector<8x512xf32> to vector<8x128xf32>
    %101 = math.tanh %100 : vector<8x128xf32>
    %102 = vector.extract_strided_slice %99 {offsets = [0, 128], sizes = [8, 128], strides = [1, 1]} : vector<8x384xf32> to vector<8x128xf32>
    %103 = arith.mulf %102, %83 : vector<8x128xf32>
    %104 = vector.extract_strided_slice %99 {offsets = [0, 0], sizes = [8, 128], strides = [1, 1]} : vector<8x384xf32> to vector<8x128xf32>
    %105 = arith.mulf %104, %101 : vector<8x128xf32>
    %106 = arith.addf %103, %105 : vector<8x128xf32>
    %107 = vector.extract_strided_slice %99 {offsets = [0, 256], sizes = [8, 128], strides = [1, 1]} : vector<8x384xf32> to vector<8x128xf32>
    %108 = math.tanh %106 : vector<8x128xf32>
    %109 = arith.mulf %107, %108 : vector<8x128xf32>
    %c32 = arith.constant 32 : index
    %c0_39 = arith.constant 0 : index
    %110 = vector.load %arg8[%c32, %c0_39] : memref<64x512xf32, #tpu.memory_space<vmem>>, vector<8x512xf32>
    %111 = arith.truncf %109 : vector<8x128xf32> to vector<8x128xbf16>
    %c0_40 = arith.constant 0 : index
    %c0_41 = arith.constant 0 : index
    %112 = vector.load %arg5[%c0_40, %c0_41] : memref<128x512xbf16, #tpu.memory_space<vmem>>, vector<128x512xbf16>
    %cst_42 = arith.constant dense<0.000000e+00> : vector<8x512xf32>
    %113 = tpu.matmul %111, %112, %cst_42 {dimension_numbers = #tpu.dot_dimension_numbers<[1], [0], [0], [1], [0, 0, 1, 1], [], []>} : vector<8x128xbf16>, vector<128x512xbf16>, vector<8x512xf32> -> vector<8x512xf32>
    %114 = arith.addf %110, %113 : vector<8x512xf32>
    %115 = vector.extract_strided_slice %114 {offsets = [0, 0], sizes = [8, 384], strides = [1, 1]} : vector<8x512xf32> to vector<8x384xf32>
    %cst_43 = arith.constant 5.000000e-01 : f32
    %116 = vector.broadcast %cst_43 : f32 to vector<8x384xf32>
    %117 = arith.mulf %116, %115 : vector<8x384xf32>
    %118 = math.tanh %117 : vector<8x384xf32>
    %cst_44 = arith.constant 5.000000e-01 : f32
    %119 = vector.broadcast %cst_44 : f32 to vector<8x384xf32>
    %120 = arith.mulf %119, %118 : vector<8x384xf32>
    %cst_45 = arith.constant 5.000000e-01 : f32
    %121 = vector.broadcast %cst_45 : f32 to vector<8x384xf32>
    %122 = arith.addf %120, %121 : vector<8x384xf32>
    %123 = vector.extract_strided_slice %114 {offsets = [0, 384], sizes = [8, 128], strides = [1, 1]} : vector<8x512xf32> to vector<8x128xf32>
    %124 = math.tanh %123 : vector<8x128xf32>
    %125 = vector.extract_strided_slice %122 {offsets = [0, 128], sizes = [8, 128], strides = [1, 1]} : vector<8x384xf32> to vector<8x128xf32>
    %126 = arith.mulf %125, %106 : vector<8x128xf32>
    %127 = vector.extract_strided_slice %122 {offsets = [0, 0], sizes = [8, 128], strides = [1, 1]} : vector<8x384xf32> to vector<8x128xf32>
    %128 = arith.mulf %127, %124 : vector<8x128xf32>
    %129 = arith.addf %126, %128 : vector<8x128xf32>
    %130 = vector.extract_strided_slice %122 {offsets = [0, 256], sizes = [8, 128], strides = [1, 1]} : vector<8x384xf32> to vector<8x128xf32>
    %131 = math.tanh %129 : vector<8x128xf32>
    %132 = arith.mulf %130, %131 : vector<8x128xf32>
    %c40 = arith.constant 40 : index
    %c0_46 = arith.constant 0 : index
    %133 = vector.load %arg8[%c40, %c0_46] : memref<64x512xf32, #tpu.memory_space<vmem>>, vector<8x512xf32>
    %134 = arith.truncf %132 : vector<8x128xf32> to vector<8x128xbf16>
    %c0_47 = arith.constant 0 : index
    %c0_48 = arith.constant 0 : index
    %135 = vector.load %arg5[%c0_47, %c0_48] : memref<128x512xbf16, #tpu.memory_space<vmem>>, vector<128x512xbf16>
    %cst_49 = arith.constant dense<0.000000e+00> : vector<8x512xf32>
    %136 = tpu.matmul %134, %135, %cst_49 {dimension_numbers = #tpu.dot_dimension_numbers<[1], [0], [0], [1], [0, 0, 1, 1], [], []>} : vector<8x128xbf16>, vector<128x512xbf16>, vector<8x512xf32> -> vector<8x512xf32>
    %137 = arith.addf %133, %136 : vector<8x512xf32>
    %138 = vector.extract_strided_slice %137 {offsets = [0, 0], sizes = [8, 384], strides = [1, 1]} : vector<8x512xf32> to vector<8x384xf32>
    %cst_50 = arith.constant 5.000000e-01 : f32
    %139 = vector.broadcast %cst_50 : f32 to vector<8x384xf32>
    %140 = arith.mulf %139, %138 : vector<8x384xf32>
    %141 = math.tanh %140 : vector<8x384xf32>
    %cst_51 = arith.constant 5.000000e-01 : f32
    %142 = vector.broadcast %cst_51 : f32 to vector<8x384xf32>
    %143 = arith.mulf %142, %141 : vector<8x384xf32>
    %cst_52 = arith.constant 5.000000e-01 : f32
    %144 = vector.broadcast %cst_52 : f32 to vector<8x384xf32>
    %145 = arith.addf %143, %144 : vector<8x384xf32>
    %146 = vector.extract_strided_slice %137 {offsets = [0, 384], sizes = [8, 128], strides = [1, 1]} : vector<8x512xf32> to vector<8x128xf32>
    %147 = math.tanh %146 : vector<8x128xf32>
    %148 = vector.extract_strided_slice %145 {offsets = [0, 128], sizes = [8, 128], strides = [1, 1]} : vector<8x384xf32> to vector<8x128xf32>
    %149 = arith.mulf %148, %129 : vector<8x128xf32>
    %150 = vector.extract_strided_slice %145 {offsets = [0, 0], sizes = [8, 128], strides = [1, 1]} : vector<8x384xf32> to vector<8x128xf32>
    %151 = arith.mulf %150, %147 : vector<8x128xf32>
    %152 = arith.addf %149, %151 : vector<8x128xf32>
    %153 = vector.extract_strided_slice %145 {offsets = [0, 256], sizes = [8, 128], strides = [1, 1]} : vector<8x384xf32> to vector<8x128xf32>
    %154 = math.tanh %152 : vector<8x128xf32>
    %155 = arith.mulf %153, %154 : vector<8x128xf32>
    %c48 = arith.constant 48 : index
    %c0_53 = arith.constant 0 : index
    %156 = vector.load %arg8[%c48, %c0_53] : memref<64x512xf32, #tpu.memory_space<vmem>>, vector<8x512xf32>
    %157 = arith.truncf %155 : vector<8x128xf32> to vector<8x128xbf16>
    %c0_54 = arith.constant 0 : index
    %c0_55 = arith.constant 0 : index
    %158 = vector.load %arg5[%c0_54, %c0_55] : memref<128x512xbf16, #tpu.memory_space<vmem>>, vector<128x512xbf16>
    %cst_56 = arith.constant dense<0.000000e+00> : vector<8x512xf32>
    %159 = tpu.matmul %157, %158, %cst_56 {dimension_numbers = #tpu.dot_dimension_numbers<[1], [0], [0], [1], [0, 0, 1, 1], [], []>} : vector<8x128xbf16>, vector<128x512xbf16>, vector<8x512xf32> -> vector<8x512xf32>
    %160 = arith.addf %156, %159 : vector<8x512xf32>
    %161 = vector.extract_strided_slice %160 {offsets = [0, 0], sizes = [8, 384], strides = [1, 1]} : vector<8x512xf32> to vector<8x384xf32>
    %cst_57 = arith.constant 5.000000e-01 : f32
    %162 = vector.broadcast %cst_57 : f32 to vector<8x384xf32>
    %163 = arith.mulf %162, %161 : vector<8x384xf32>
    %164 = math.tanh %163 : vector<8x384xf32>
    %cst_58 = arith.constant 5.000000e-01 : f32
    %165 = vector.broadcast %cst_58 : f32 to vector<8x384xf32>
    %166 = arith.mulf %165, %164 : vector<8x384xf32>
    %cst_59 = arith.constant 5.000000e-01 : f32
    %167 = vector.broadcast %cst_59 : f32 to vector<8x384xf32>
    %168 = arith.addf %166, %167 : vector<8x384xf32>
    %169 = vector.extract_strided_slice %160 {offsets = [0, 384], sizes = [8, 128], strides = [1, 1]} : vector<8x512xf32> to vector<8x128xf32>
    %170 = math.tanh %169 : vector<8x128xf32>
    %171 = vector.extract_strided_slice %168 {offsets = [0, 128], sizes = [8, 128], strides = [1, 1]} : vector<8x384xf32> to vector<8x128xf32>
    %172 = arith.mulf %171, %152 : vector<8x128xf32>
    %173 = vector.extract_strided_slice %168 {offsets = [0, 0], sizes = [8, 128], strides = [1, 1]} : vector<8x384xf32> to vector<8x128xf32>
    %174 = arith.mulf %173, %170 : vector<8x128xf32>
    %175 = arith.addf %172, %174 : vector<8x128xf32>
    %176 = vector.extract_strided_slice %168 {offsets = [0, 256], sizes = [8, 128], strides = [1, 1]} : vector<8x384xf32> to vector<8x128xf32>
    %177 = math.tanh %175 : vector<8x128xf32>
    %178 = arith.mulf %176, %177 : vector<8x128xf32>
    %c56 = arith.constant 56 : index
    %c0_60 = arith.constant 0 : index
    %179 = vector.load %arg8[%c56, %c0_60] : memref<64x512xf32, #tpu.memory_space<vmem>>, vector<8x512xf32>
    %180 = arith.truncf %178 : vector<8x128xf32> to vector<8x128xbf16>
    %c0_61 = arith.constant 0 : index
    %c0_62 = arith.constant 0 : index
    %181 = vector.load %arg5[%c0_61, %c0_62] : memref<128x512xbf16, #tpu.memory_space<vmem>>, vector<128x512xbf16>
    %cst_63 = arith.constant dense<0.000000e+00> : vector<8x512xf32>
    %182 = tpu.matmul %180, %181, %cst_63 {dimension_numbers = #tpu.dot_dimension_numbers<[1], [0], [0], [1], [0, 0, 1, 1], [], []>} : vector<8x128xbf16>, vector<128x512xbf16>, vector<8x512xf32> -> vector<8x512xf32>
    %183 = arith.addf %179, %182 : vector<8x512xf32>
    %184 = vector.extract_strided_slice %183 {offsets = [0, 0], sizes = [8, 384], strides = [1, 1]} : vector<8x512xf32> to vector<8x384xf32>
    %cst_64 = arith.constant 5.000000e-01 : f32
    %185 = vector.broadcast %cst_64 : f32 to vector<8x384xf32>
    %186 = arith.mulf %185, %184 : vector<8x384xf32>
    %187 = math.tanh %186 : vector<8x384xf32>
    %cst_65 = arith.constant 5.000000e-01 : f32
    %188 = vector.broadcast %cst_65 : f32 to vector<8x384xf32>
    %189 = arith.mulf %188, %187 : vector<8x384xf32>
    %cst_66 = arith.constant 5.000000e-01 : f32
    %190 = vector.broadcast %cst_66 : f32 to vector<8x384xf32>
    %191 = arith.addf %189, %190 : vector<8x384xf32>
    %192 = vector.extract_strided_slice %183 {offsets = [0, 384], sizes = [8, 128], strides = [1, 1]} : vector<8x512xf32> to vector<8x128xf32>
    %193 = math.tanh %192 : vector<8x128xf32>
    %194 = vector.extract_strided_slice %191 {offsets = [0, 128], sizes = [8, 128], strides = [1, 1]} : vector<8x384xf32> to vector<8x128xf32>
    %195 = arith.mulf %194, %175 : vector<8x128xf32>
    %196 = vector.extract_strided_slice %191 {offsets = [0, 0], sizes = [8, 128], strides = [1, 1]} : vector<8x384xf32> to vector<8x128xf32>
    %197 = arith.mulf %196, %193 : vector<8x128xf32>
    %198 = arith.addf %195, %197 : vector<8x128xf32>
    %199 = vector.extract_strided_slice %191 {offsets = [0, 256], sizes = [8, 128], strides = [1, 1]} : vector<8x384xf32> to vector<8x128xf32>
    %200 = math.tanh %198 : vector<8x128xf32>
    %201 = arith.mulf %199, %200 : vector<8x128xf32>
    %c0_67 = arith.constant 0 : index
    %c0_68 = arith.constant 0 : index
    %202 = vector.load %arg6[%c0_67, %c0_68] : memref<264x128xf32, #tpu.memory_space<vmem>>, vector<128x128xf32>
    %c128 = arith.constant 128 : index
    %c0_69 = arith.constant 0 : index
    %203 = vector.load %arg6[%c128, %c0_69] : memref<264x128xf32, #tpu.memory_space<vmem>>, vector<1x128xf32>
    %c129 = arith.constant 129 : index
    %c0_70 = arith.constant 0 : index
    %204 = vector.load %arg6[%c129, %c0_70] : memref<264x128xf32, #tpu.memory_space<vmem>>, vector<1x128xf32>
    %c136 = arith.constant 136 : index
    %c0_71 = arith.constant 0 : index
    %205 = vector.load %arg6[%c136, %c0_71] : memref<264x128xf32, #tpu.memory_space<vmem>>, vector<128x128xf32>
    %cst_72 = arith.constant dense<0.000000e+00> : vector<8x128xf32>
    %206 = tpu.matmul %201, %202, %cst_72 {dimension_numbers = #tpu.dot_dimension_numbers<[1], [0], [0], [1], [0, 0, 1, 1], [], []>} : vector<8x128xf32>, vector<128x128xf32>, vector<8x128xf32> -> vector<8x128xf32>
    %207 = vector.broadcast %203 : vector<1x128xf32> to vector<8x128xf32>
    %208 = arith.addf %206, %207 : vector<8x128xf32>
    %cst_73 = arith.constant 0.000000e+00 : f32
    %209 = vector.broadcast %cst_73 : f32 to vector<8x128xf32>
    %210 = arith.cmpf ogt, %208, %209 : vector<8x128xf32>
    %cst_74 = arith.constant 0.00999999977 : f32
    %211 = vector.broadcast %cst_74 : f32 to vector<8x128xf32>
    %212 = arith.mulf %211, %208 : vector<8x128xf32>
    %213 = arith.select %210, %208, %212 : vector<8x128xi1>, vector<8x128xf32>
    %cst_75 = arith.constant dense<0.000000e+00> : vector<8x128xf32>
    %214 = tpu.matmul %213, %205, %cst_75 {dimension_numbers = #tpu.dot_dimension_numbers<[1], [0], [0], [1], [0, 0, 1, 1], [], []>} : vector<8x128xf32>, vector<128x128xf32>, vector<8x128xf32> -> vector<8x128xf32>
    %215 = vector.broadcast %204 : vector<1x128xf32> to vector<8x128xf32>
    %216 = arith.addf %214, %215 : vector<8x128xf32>
    %c0_76 = arith.constant 0 : index
    %c0_77 = arith.constant 0 : index
    %217 = vector.load %arg7[%c0_76, %c0_77] : memref<8x128xf32, #tpu.memory_space<vmem>>, vector<8x128xf32>
    tpu.vector_store %arg7[%c0_76, %c0_77], %216 {strides = array<i32>} : memref<8x128xf32, #tpu.memory_space<vmem>>, vector<8x128xf32>,
    return
  }
  func.func @transform_0(%arg0: i32) -> (i32, i32) {
    %c0_i32 = arith.constant 0 : i32
    %c0_i32_0 = arith.constant 0 : i32
    %c0_i32_1 = arith.constant 0 : i32
    return %c0_i32, %c0_i32_0 : i32, i32
  }
  func.func @transform_1(%arg0: i32) -> (i32, i32) {
    %c0_i32 = arith.constant 0 : i32
    %c0_i32_0 = arith.constant 0 : i32
    %c0_i32_1 = arith.constant 0 : i32
    return %c0_i32, %c0_i32_0 : i32, i32
  }
  func.func @transform_2(%arg0: i32) -> (i32, i32) {
    %c0_i32 = arith.constant 0 : i32
    %c0_i32_0 = arith.constant 0 : i32
    %c0_i32_1 = arith.constant 0 : i32
    return %c0_i32, %c0_i32_0 : i32, i32
  }
  func.func @transform_3(%arg0: i32) -> (i32, i32) {
    %c0_i32 = arith.constant 0 : i32
    %c0_i32_0 = arith.constant 0 : i32
    %c0_i32_1 = arith.constant 0 : i32
    return %c0_i32, %c0_i32_0 : i32, i32
  }
  func.func @transform_4(%arg0: i32) -> (i32, i32) {
    %c0_i32 = arith.constant 0 : i32
    %c0_i32_0 = arith.constant 0 : i32
    %c0_i32_1 = arith.constant 0 : i32
    return %c0_i32, %c0_i32_0 : i32, i32
  }
  func.func @transform_5(%arg0: i32) -> (i32, i32) {
    %c0_i32 = arith.constant 0 : i32
    %c0_i32_0 = arith.constant 0 : i32
    %c0_i32_1 = arith.constant 0 : i32
    return %c0_i32, %c0_i32_0 : i32, i32
  }
  func.func @transform_6(%arg0: i32) -> (i32, i32) {
    %c0_i32 = arith.constant 0 : i32
    %c0_i32_0 = arith.constant 0 : i32
    %c0_i32_1 = arith.constant 0 : i32
    return %c0_i32, %c0_i32_0 : i32, i32
  }
}

</mosaic_0001>

<llo_original>
// kernel: tpu_custom_call.1
$region0: #{tpu_custom_call.1}
  #allocation0 [shape = 'u32[]', space=smem, size = 0x4, offset = 0x4, fixed_abs, tag = 'smem constant byte address 0x4 - core index']
  #allocation1 [shape = 'u32[144,128]{1,0:T(1,128)}', space=vmem, size = 0x12000, scoped, tag = 'internal scratch']
  #allocation2 [shape = 'f32[64,512]{1,0:T(8,128)}', space=vmem, size = 0x20000, scoped, tag = 'scratch operand']
  %s0 = inlined_call_operand.vmem [shape: f32[64,2], index: 0, kind: input, shape index: {}]
  %s1 = inlined_call_operand.vmem [shape: f32[8,128], index: 1, kind: input, shape index: {}]
  %s2 = inlined_call_operand.vmem [shape: f32[8,128], index: 2, kind: input, shape index: {}]
  %s3 = inlined_call_operand.vmem [shape: f32[3,512], index: 3, kind: input, shape index: {}]
  %s4 = inlined_call_operand.hbm [shape: bf16[128,512], index: 4, kind: input, shape index: {}]
  %s5 = inlined_call_operand.hbm [shape: f32[264,128], index: 5, kind: input, shape index: {}]
  %s6 = inlined_call_operand.hbm [shape: f32[8,128], index: 6, kind: output, shape index: {}]
  %s7 = sld [smem:[#allocation0]]
  $region42: #{tpu_custom_call.1} parent=0
    _
  %s9 = ssub.s32 1, %s7
  %s10 = scalar_select 0, %s9, %s7
  $region1: #{tpu_custom_call.1} parent=0
    #allocation3 [shape = 'u8[131072]{0}', space=vmem, size = 0x20000, scoped, tag = 'input window, operand 4, single buffered']
    #allocation4 [shape = 's32[1]{0}', space=sflag, size = 0x4, scoped, tag = 'scoped memory for tpu_custom_call.1']
    #allocation5 [shape = 's32[1]{0}', space=sflag, size = 0x4, scoped, tag = 'scoped memory for tpu_custom_call.1']
    #allocation6 [shape = 'u8[135168]{0}', space=vmem, size = 0x21000, scoped, tag = 'input window, operand 5, single buffered']
    #allocation7 [shape = 's32[1]{0}', space=sflag, size = 0x4, scoped, tag = 'scoped memory for tpu_custom_call.1']
    #allocation8 [shape = 'u8[4096]{0}', space=vmem, size = 0x1000, scoped, tag = 'output window, operand 0, single buffered']
    %11 = vsyncpa [#allocation4], 0
    %12 = vsyncpa [#allocation7], 0
    %13 = vsyncpa [#allocation5], 0
    // Predicated region
    $region2: #{tpu_custom_call.1} parent=1 // pred_check
      _
    $region3: #{tpu_custom_call.1} parent=1 // pred_check_branch
      %15 = sbr.rel (0) target = $region5
    $region4: #{tpu_custom_call.1} parent=1 // pred_region
      _
    $region5: #{tpu_custom_call.1} parent=1 // pred_fallthru
      _
    // Predicated region
    $region6: #{tpu_custom_call.1} parent=1 // pred_check
      _
    $region7: #{tpu_custom_call.1} parent=1 // pred_check_branch
      %17 = sbr.rel (0) target = $region9
    $region8: #{tpu_custom_call.1} parent=1 // pred_region
      _
    $region9: #{tpu_custom_call.1} parent=1 // pred_fallthru
      _
    // Predicated region
    $region10: #{tpu_custom_call.1} parent=1 // pred_check
      _
    $region11: #{tpu_custom_call.1} parent=1 // pred_check_branch
      %19 = sbr.rel (0) target = $region13
    $region12: #{tpu_custom_call.1} parent=1 // pred_region
      _
    $region13: #{tpu_custom_call.1} parent=1 // pred_fallthru
      _
    // Predicated region
    $region14: #{tpu_custom_call.1} parent=1 // pred_check
      _
    $region15: #{tpu_custom_call.1} parent=1 // pred_check_branch
      %21 = sbr.rel (0) target = $region17
    $region16: #{tpu_custom_call.1} parent=1 // pred_region
      _
    $region17: #{tpu_custom_call.1} parent=1 // pred_fallthru
      _
    // Predicated region
    $region18: #{tpu_custom_call.1} parent=1 // pred_check
      _
    $region19: #{tpu_custom_call.1} parent=1 // pred_check_branch
      %23 = sbr.rel (0) target = $region21
    $region20: #{tpu_custom_call.1} parent=1 // pred_region
      %s25 = ssub.s32 4096, 4096
      %26 = vsyncadd [#allocation4], %s25
      %s27 = sshll.u32 [#allocation3], 4
      %s28 = int_to_ptr.vmem [resolvable:$true] %s27
      %33 = dma.hbm_to_vmem [thread:$0]  %s4, 4096, %s28, [#allocation4], 256, 256, 16
    $region21: #{tpu_custom_call.1} parent=1 // pred_fallthru
      _
    // Predicated region
    $region22: #{tpu_custom_call.1} parent=1 // pred_check
      _
    $region23: #{tpu_custom_call.1} parent=1 // pred_check_branch
      %35 = sbr.rel (0) target = $region25
    $region24: #{tpu_custom_call.1} parent=1 // pred_region
      %s37 = ssub.s32 4224, 4224
      %38 = vsyncadd [#allocation7], %s37
      %s39 = sshll.u32 [#allocation6], 4
      %s40 = int_to_ptr.vmem [resolvable:$true] %s39
      %45 = dma.hbm_to_vmem [thread:$0]  %s5, 4224, %s40, [#allocation7], 128, 128, 8
    $region25: #{tpu_custom_call.1} parent=1 // pred_fallthru
      _
    // Predicated region
    $region26: #{tpu_custom_call.1} parent=1 // pred_check
      _
    $region27: #{tpu_custom_call.1} parent=1 // pred_check_branch
      %47 = sbr.rel (0) target = $region29
    $region28: #{tpu_custom_call.1} parent=1 // pred_region
      %48 = dma.done [#allocation4], 4096
    $region29: #{tpu_custom_call.1} parent=1 // pred_fallthru
      _
    // Predicated region
    $region30: #{tpu_custom_call.1} parent=1 // pred_check
      _
    $region31: #{tpu_custom_call.1} parent=1 // pred_check_branch
      %50 = sbr.rel (0) target = $region33
    $region32: #{tpu_custom_call.1} parent=1 // pred_region
      %51 = dma.done [#allocation7], 4224
    $region33: #{tpu_custom_call.1} parent=1 // pred_fallthru
      _
    %v53 = vld [vmem:[%s0] sm:$0xff]
    %v54 = vld [vmem:[%s0 + $0x8] sm:$0xff]
    %v55 = vld [vmem:[%s0 + $0x10] sm:$0xff]
    %v56 = vld [vmem:[%s0 + $0x18] sm:$0xff]
    %v57 = vld [vmem:[%s0 + $0x20] sm:$0xff]
    %v58 = vld [vmem:[%s0 + $0x28] sm:$0xff]
    %v59 = vld [vmem:[%s0 + $0x30] sm:$0xff]
    %v60 = vld [vmem:[%s0 + $0x38] sm:$0xff]
    %v61 = vld [vmem:[%s3] ss:$4 sm:$0xf]
    %63 = vset.pattern.permute.xlu0 0
    %64 = vperm.xlu0 %63, %v53
    %v65 = vpop.permute.xlu0 %64
    %68 = vset.pattern.permute.xlu0 0
    %69 = vperm.xlu0 %68, %v54
    %v70 = vpop.permute.xlu0 %69
    %73 = vset.pattern.permute.xlu0 0
    %74 = vperm.xlu0 %73, %v55
    %v75 = vpop.permute.xlu0 %74
    %78 = vset.pattern.permute.xlu0 0
    %79 = vperm.xlu0 %78, %v56
    %v80 = vpop.permute.xlu0 %79
    %83 = vset.pattern.permute.xlu0 0
    %84 = vperm.xlu0 %83, %v57
    %v85 = vpop.permute.xlu0 %84
    %88 = vset.pattern.permute.xlu0 0
    %89 = vperm.xlu0 %88, %v58
    %v90 = vpop.permute.xlu0 %89
    %93 = vset.pattern.permute.xlu0 0
    %94 = vperm.xlu0 %93, %v59
    %v95 = vpop.permute.xlu0 %94
    %98 = vset.pattern.permute.xlu0 0
    %99 = vperm.xlu0 %98, %v60
    %v100 = vpop.permute.xlu0 %99
    %v103 = vlaneseq
    %v104 = vshrl.u32 %v103, 7
    %v105 = vsub.s32 0, %v104
    %v106 = vrot.slane %v61, %v105
    %v107 = vlaneseq
    %v108 = vshrl.u32 %v107, 7
    %v109 = vsub.s32 1, %v108
    %v110 = vrot.slane %v61, %v109
    %v111 = vlaneseq
    %v112 = vshrl.u32 %v111, 7
    %v113 = vsub.s32 2, %v112
    %v114 = vrot.slane %v61, %v113
    %v115 = vlaneseq
    %v116 = vshrl.u32 %v115, 7
    %v117 = vsub.s32 3, %v116
    %v118 = vrot.slane %v61, %v117
    %v123 = vmul.f32 %v65, %v106
    %v124 = vmul.f32 %v65, %v110
    %v125 = vmul.f32 %v65, %v114
    %v126 = vmul.f32 %v65, %v118
    %v127 = vmul.f32 %v70, %v106
    %v128 = vmul.f32 %v70, %v110
    %v129 = vmul.f32 %v70, %v114
    %v130 = vmul.f32 %v70, %v118
    %v131 = vmul.f32 %v75, %v106
    %v132 = vmul.f32 %v75, %v110
    %v133 = vmul.f32 %v75, %v114
    %v134 = vmul.f32 %v75, %v118
    %v135 = vmul.f32 %v80, %v106
    %v136 = vmul.f32 %v80, %v110
    %v137 = vmul.f32 %v80, %v114
    %v138 = vmul.f32 %v80, %v118
    %v139 = vmul.f32 %v85, %v106
    %v140 = vmul.f32 %v85, %v110
    %v141 = vmul.f32 %v85, %v114
    %v142 = vmul.f32 %v85, %v118
    %v143 = vmul.f32 %v90, %v106
    %v144 = vmul.f32 %v90, %v110
    %v145 = vmul.f32 %v90, %v114
    %v146 = vmul.f32 %v90, %v118
    %v147 = vmul.f32 %v95, %v106
    %v148 = vmul.f32 %v95, %v110
    %v149 = vmul.f32 %v95, %v114
    %v150 = vmul.f32 %v95, %v118
    %v151 = vmul.f32 %v100, %v106
    %v152 = vmul.f32 %v100, %v110
    %v153 = vmul.f32 %v100, %v114
    %v154 = vmul.f32 %v100, %v118
    %s155 = scalar_lea.vmem %s3, 1
    %v156 = vld [vmem:[%s155] ss:$4 sm:$0xf]
    %157 = vset.pattern.permute.xlu0 1
    %158 = vperm.xlu0 %157, %v53
    %v159 = vpop.permute.xlu0 %158
    %161 = vset.pattern.permute.xlu0 1
    %162 = vperm.xlu0 %161, %v54
    %v163 = vpop.permute.xlu0 %162
    %165 = vset.pattern.permute.xlu0 1
    %166 = vperm.xlu0 %165, %v55
    %v167 = vpop.permute.xlu0 %166
    %169 = vset.pattern.permute.xlu0 1
    %170 = vperm.xlu0 %169, %v56
    %v171 = vpop.permute.xlu0 %170
    %173 = vset.pattern.permute.xlu0 1
    %174 = vperm.xlu0 %173, %v57
    %v175 = vpop.permute.xlu0 %174
    %177 = vset.pattern.permute.xlu0 1
    %178 = vperm.xlu0 %177, %v58
    %v179 = vpop.permute.xlu0 %178
    %181 = vset.pattern.permute.xlu0 1
    %182 = vperm.xlu0 %181, %v59
    %v183 = vpop.permute.xlu0 %182
    %185 = vset.pattern.permute.xlu0 1
    %186 = vperm.xlu0 %185, %v60
    %v187 = vpop.permute.xlu0 %186
    %v190 = vlaneseq
    %v191 = vshrl.u32 %v190, 7
    %v192 = vsub.s32 0, %v191
    %v193 = vrot.slane %v156, %v192
    %v194 = vlaneseq
    %v195 = vshrl.u32 %v194, 7
    %v196 = vsub.s32 1, %v195
    %v197 = vrot.slane %v156, %v196
    %v198 = vlaneseq
    %v199 = vshrl.u32 %v198, 7
    %v200 = vsub.s32 2, %v199
    %v201 = vrot.slane %v156, %v200
    %v202 = vlaneseq
    %v203 = vshrl.u32 %v202, 7
    %v204 = vsub.s32 3, %v203
    %v205 = vrot.slane %v156, %v204
    %v210 = vmul.f32 %v159, %v193
    %v211 = vmul.f32 %v159, %v197
    %v212 = vmul.f32 %v159, %v201
    %v213 = vmul.f32 %v159, %v205
    %v214 = vmul.f32 %v163, %v193
    %v215 = vmul.f32 %v163, %v197
    %v216 = vmul.f32 %v163, %v201
    %v217 = vmul.f32 %v163, %v205
    %v218 = vmul.f32 %v167, %v193
    %v219 = vmul.f32 %v167, %v197
    %v220 = vmul.f32 %v167, %v201
    %v221 = vmul.f32 %v167, %v205
    %v222 = vmul.f32 %v171, %v193
    %v223 = vmul.f32 %v171, %v197
    %v224 = vmul.f32 %v171, %v201
    %v225 = vmul.f32 %v171, %v205
    %v226 = vmul.f32 %v175, %v193
    %v227 = vmul.f32 %v175, %v197
    %v228 = vmul.f32 %v175, %v201
    %v229 = vmul.f32 %v175, %v205
    %v230 = vmul.f32 %v179, %v193
    %v231 = vmul.f32 %v179, %v197
    %v232 = vmul.f32 %v179, %v201
    %v233 = vmul.f32 %v179, %v205
    %v234 = vmul.f32 %v183, %v193
    %v235 = vmul.f32 %v183, %v197
    %v236 = vmul.f32 %v183, %v201
    %v237 = vmul.f32 %v183, %v205
    %v238 = vmul.f32 %v187, %v193
    %v239 = vmul.f32 %v187, %v197
    %v240 = vmul.f32 %v187, %v201
    %v241 = vmul.f32 %v187, %v205
    %v242 = vadd.f32 %v123, %v210
    %v243 = vadd.f32 %v124, %v211
    %v244 = vadd.f32 %v125, %v212
    %v245 = vadd.f32 %v126, %v213
    %v246 = vadd.f32 %v127, %v214
    %v247 = vadd.f32 %v128, %v215
    %v248 = vadd.f32 %v129, %v216
    %v249 = vadd.f32 %v130, %v217
    %v250 = vadd.f32 %v131, %v218
    %v251 = vadd.f32 %v132, %v219
    %v252 = vadd.f32 %v133, %v220
    %v253 = vadd.f32 %v134, %v221
    %v254 = vadd.f32 %v135, %v222
    %v255 = vadd.f32 %v136, %v223
    %v256 = vadd.f32 %v137, %v224
    %v257 = vadd.f32 %v138, %v225
    %v258 = vadd.f32 %v139, %v226
    %v259 = vadd.f32 %v140, %v227
    %v260 = vadd.f32 %v141, %v228
    %v261 = vadd.f32 %v142, %v229
    %v262 = vadd.f32 %v143, %v230
    %v263 = vadd.f32 %v144, %v231
    %v264 = vadd.f32 %v145, %v232
    %v265 = vadd.f32 %v146, %v233
    %v266 = vadd.f32 %v147, %v234
    %v267 = vadd.f32 %v148, %v235
    %v268 = vadd.f32 %v149, %v236
    %v269 = vadd.f32 %v150, %v237
    %v270 = vadd.f32 %v151, %v238
    %v271 = vadd.f32 %v152, %v239
    %v272 = vadd.f32 %v153, %v240
    %v273 = vadd.f32 %v154, %v241
    %s274 = scalar_lea.vmem %s3, 2
    %v275 = vld [vmem:[%s274] ss:$4 sm:$0xf]
    %v277 = vlaneseq
    %v278 = vshrl.u32 %v277, 7
    %v279 = vsub.s32 0, %v278
    %v280 = vrot.slane %v275, %v279
    %v281 = vlaneseq
    %v282 = vshrl.u32 %v281, 7
    %v283 = vsub.s32 1, %v282
    %v284 = vrot.slane %v275, %v283
    %v285 = vlaneseq
    %v286 = vshrl.u32 %v285, 7
    %v287 = vsub.s32 2, %v286
    %v288 = vrot.slane %v275, %v287
    %v289 = vlaneseq
    %v290 = vshrl.u32 %v289, 7
    %v291 = vsub.s32 3, %v290
    %v292 = vrot.slane %v275, %v291
    %v297 = vadd.f32 %v242, %v280
    %v298 = vadd.f32 %v243, %v284
    %v299 = vadd.f32 %v244, %v288
    %v300 = vadd.f32 %v245, %v292
    %v301 = vadd.f32 %v246, %v280
    %v302 = vadd.f32 %v247, %v284
    %v303 = vadd.f32 %v248, %v288
    %v304 = vadd.f32 %v249, %v292
    %v305 = vadd.f32 %v250, %v280
    %v306 = vadd.f32 %v251, %v284
    %v307 = vadd.f32 %v252, %v288
    %v308 = vadd.f32 %v253, %v292
    %v309 = vadd.f32 %v254, %v280
    %v310 = vadd.f32 %v255, %v284
    %v311 = vadd.f32 %v256, %v288
    %v312 = vadd.f32 %v257, %v292
    %v313 = vadd.f32 %v258, %v280
    %v314 = vadd.f32 %v259, %v284
    %v315 = vadd.f32 %v260, %v288
    %v316 = vadd.f32 %v261, %v292
    %v317 = vadd.f32 %v262, %v280
    %v318 = vadd.f32 %v263, %v284
    %v319 = vadd.f32 %v264, %v288
    %v320 = vadd.f32 %v265, %v292
    %v321 = vadd.f32 %v266, %v280
    %v322 = vadd.f32 %v267, %v284
    %v323 = vadd.f32 %v268, %v288
    %v324 = vadd.f32 %v269, %v292
    %v325 = vadd.f32 %v270, %v280
    %v326 = vadd.f32 %v271, %v284
    %v327 = vadd.f32 %v272, %v288
    %v328 = vadd.f32 %v273, %v292
    %329 = vst [vmem:[#allocation2] sm:$0xff] %v297
    %330 = vst [vmem:[#allocation2 + $0x8] sm:$0xff] %v298
    %331 = vst [vmem:[#allocation2 + $0x10] sm:$0xff] %v299
    %332 = vst [vmem:[#allocation2 + $0x18] sm:$0xff] %v300
    %333 = vst [vmem:[#allocation2 + $0x20] sm:$0xff] %v301
    %334 = vst [vmem:[#allocation2 + $0x28] sm:$0xff] %v302
    %335 = vst [vmem:[#allocation2 + $0x30] sm:$0xff] %v303
    %336 = vst [vmem:[#allocation2 + $0x38] sm:$0xff] %v304
    %337 = vst [vmem:[#allocation2 + $0x40] sm:$0xff] %v305
    %338 = vst [vmem:[#allocation2 + $0x48] sm:$0xff] %v306
    %339 = vst [vmem:[#allocation2 + $0x50] sm:$0xff] %v307
    %340 = vst [vmem:[#allocation2 + $0x58] sm:$0xff] %v308
    %341 = vst [vmem:[#allocation2 + $0x60] sm:$0xff] %v309
    %342 = vst [vmem:[#allocation2 + $0x68] sm:$0xff] %v310
    %343 = vst [vmem:[#allocation2 + $0x70] sm:$0xff] %v311
    %344 = vst [vmem:[#allocation2 + $0x78] sm:$0xff] %v312
    %345 = vst [vmem:[#allocation2 + $0x80] sm:$0xff] %v313
    %346 = vst [vmem:[#allocation2 + $0x88] sm:$0xff] %v314
    %347 = vst [vmem:[#allocation2 + $0x90] sm:$0xff] %v315
    %348 = vst [vmem:[#allocation2 + $0x98] sm:$0xff] %v316
    %349 = vst [vmem:[#allocation2 + $0xa0] sm:$0xff] %v317
    %350 = vst [vmem:[#allocation2 + $0xa8] sm:$0xff] %v318
    %351 = vst [vmem:[#allocation2 + $0xb0] sm:$0xff] %v319
    %352 = vst [vmem:[#allocation2 + $0xb8] sm:$0xff] %v320
    %353 = vst [vmem:[#allocation2 + $0xc0] sm:$0xff] %v321
    %354 = vst [vmem:[#allocation2 + $0xc8] sm:$0xff] %v322
    %355 = vst [vmem:[#allocation2 + $0xd0] sm:$0xff] %v323
    %356 = vst [vmem:[#allocation2 + $0xd8] sm:$0xff] %v324
    %357 = vst [vmem:[#allocation2 + $0xe0] sm:$0xff] %v325
    %358 = vst [vmem:[#allocation2 + $0xe8] sm:$0xff] %v326
    %359 = vst [vmem:[#allocation2 + $0xf0] sm:$0xff] %v327
    %360 = vst [vmem:[#allocation2 + $0xf8] sm:$0xff] %v328
    %v361 = vld [vmem:[%s1] sm:$0xff]
    %v362 = vld [vmem:[%s2] sm:$0xff]
    %v363 = vld [vmem:[#allocation2] sm:$0xff]
    %v364 = vld [vmem:[#allocation2 + $0x8] sm:$0xff]
    %v365 = vld [vmem:[#allocation2 + $0x10] sm:$0xff]
    %v366 = vld [vmem:[#allocation2 + $0x18] sm:$0xff]
    %v367 = vpack.c.bf16 %v361, %v361
    %v368 = vld [vmem:[#allocation3] sm:$0xff]
    %v369 = vld [vmem:[#allocation3 + $0x8] sm:$0xff]
    %v370 = vld [vmem:[#allocation3 + $0x10] sm:$0xff]
    %v371 = vld [vmem:[#allocation3 + $0x18] sm:$0xff]
    %v372 = vld [vmem:[#allocation3 + $0x20] sm:$0xff]
    %v373 = vld [vmem:[#allocation3 + $0x28] sm:$0xff]
    %v374 = vld [vmem:[#allocation3 + $0x30] sm:$0xff]
    %v375 = vld [vmem:[#allocation3 + $0x38] sm:$0xff]
    %v376 = vld [vmem:[#allocation3 + $0x40] sm:$0xff]
    %v377 = vld [vmem:[#allocation3 + $0x48] sm:$0xff]
    %v378 = vld [vmem:[#allocation3 + $0x50] sm:$0xff]
    %v379 = vld [vmem:[#allocation3 + $0x58] sm:$0xff]
    %v380 = vld [vmem:[#allocation3 + $0x60] sm:$0xff]
    %v381 = vld [vmem:[#allocation3 + $0x68] sm:$0xff]
    %v382 = vld [vmem:[#allocation3 + $0x70] sm:$0xff]
    %v383 = vld [vmem:[#allocation3 + $0x78] sm:$0xff]
    %v384 = vld [vmem:[#allocation3 + $0x80] sm:$0xff]
    %v385 = vld [vmem:[#allocation3 + $0x88] sm:$0xff]
    %v386 = vld [vmem:[#allocation3 + $0x90] sm:$0xff]
    %v387 = vld [vmem:[#allocation3 + $0x98] sm:$0xff]
    %v388 = vld [vmem:[#allocation3 + $0xa0] sm:$0xff]
    %v389 = vld [vmem:[#allocation3 + $0xa8] sm:$0xff]
    %v390 = vld [vmem:[#allocation3 + $0xb0] sm:$0xff]
    %v391 = vld [vmem:[#allocation3 + $0xb8] sm:$0xff]
    %v392 = vld [vmem:[#allocation3 + $0xc0] sm:$0xff]
    %v393 = vld [vmem:[#allocation3 + $0xc8] sm:$0xff]
    %v394 = vld [vmem:[#allocation3 + $0xd0] sm:$0xff]
    %v395 = vld [vmem:[#allocation3 + $0xd8] sm:$0xff]
    %v396 = vld [vmem:[#allocation3 + $0xe0] sm:$0xff]
    %v397 = vld [vmem:[#allocation3 + $0xe8] sm:$0xff]
    %v398 = vld [vmem:[#allocation3 + $0xf0] sm:$0xff]
    %v399 = vld [vmem:[#allocation3 + $0xf8] sm:$0xff]
    %v432 = vunpack.c.l.b16 %v368
    %v433 = vunpack.c.h.b16 %v368
    %v434 = vunpack.c.l.b16 %v369
    %v435 = vunpack.c.h.b16 %v369
    %v436 = vunpack.c.l.b16 %v370
    %v437 = vunpack.c.h.b16 %v370
    %v438 = vunpack.c.l.b16 %v371
    %v439 = vunpack.c.h.b16 %v371
    %v440 = vunpack.c.l.b16 %v372
    %v441 = vunpack.c.h.b16 %v372
    %v442 = vunpack.c.l.b16 %v373
    %v443 = vunpack.c.h.b16 %v373
    %v444 = vunpack.c.l.b16 %v374
    %v445 = vunpack.c.h.b16 %v374
    %v446 = vunpack.c.l.b16 %v375
    %v447 = vunpack.c.h.b16 %v375
    %v448 = vunpack.c.l.b16 %v376
    %v449 = vunpack.c.h.b16 %v376
    %v450 = vunpack.c.l.b16 %v377
    %v451 = vunpack.c.h.b16 %v377
    %v452 = vunpack.c.l.b16 %v378
    %v453 = vunpack.c.h.b16 %v378
    %v454 = vunpack.c.l.b16 %v379
    %v455 = vunpack.c.h.b16 %v379
    %v456 = vunpack.c.l.b16 %v380
    %v457 = vunpack.c.h.b16 %v380
    %v458 = vunpack.c.l.b16 %v381
    %v459 = vunpack.c.h.b16 %v381
    %v460 = vunpack.c.l.b16 %v382
    %v461 = vunpack.c.h.b16 %v382
    %v462 = vunpack.c.l.b16 %v383
    %v463 = vunpack.c.h.b16 %v383
    %v464 = vunpack.c.l.b16 %v384
    %v465 = vunpack.c.h.b16 %v384
    %v466 = vunpack.c.l.b16 %v385
    %v467 = vunpack.c.h.b16 %v385
    %v468 = vunpack.c.l.b16 %v386
    %v469 = vunpack.c.h.b16 %v386
    %v470 = vunpack.c.l.b16 %v387
    %v471 = vunpack.c.h.b16 %v387
    %v472 = vunpack.c.l.b16 %v388
    %v473 = vunpack.c.h.b16 %v388
    %v474 = vunpack.c.l.b16 %v389
    %v475 = vunpack.c.h.b16 %v389
    %v476 = vunpack.c.l.b16 %v390
    %v477 = vunpack.c.h.b16 %v390
    %v478 = vunpack.c.l.b16 %v391
    %v479 = vunpack.c.h.b16 %v391
    %v480 = vunpack.c.l.b16 %v392
    %v481 = vunpack.c.h.b16 %v392
    %v482 = vunpack.c.l.b16 %v393
    %v483 = vunpack.c.h.b16 %v393
    %v484 = vunpack.c.l.b16 %v394
    %v485 = vunpack.c.h.b16 %v394
    %v486 = vunpack.c.l.b16 %v395
    %v487 = vunpack.c.h.b16 %v395
    %v488 = vunpack.c.l.b16 %v396
    %v489 = vunpack.c.h.b16 %v396
    %v490 = vunpack.c.l.b16 %v397
    %v491 = vunpack.c.h.b16 %v397
    %v492 = vunpack.c.l.b16 %v398
    %v493 = vunpack.c.h.b16 %v398
    %v494 = vunpack.c.l.b16 %v399
    %v495 = vunpack.c.h.b16 %v399
    %v496 = vpack.c.b16 %v436, %v432
    %v497 = vpack.c.b16 %v437, %v433
    %v498 = vpack.c.b16 %v438, %v434
    %v499 = vpack.c.b16 %v439, %v435
    %v500 = vpack.c.b16 %v444, %v440
    %v501 = vpack.c.b16 %v445, %v441
    %v502 = vpack.c.b16 %v446, %v442
    %v503 = vpack.c.b16 %v447, %v443
    %v504 = vpack.c.b16 %v452, %v448
    %v505 = vpack.c.b16 %v453, %v449
    %v506 = vpack.c.b16 %v454, %v450
    %v507 = vpack.c.b16 %v455, %v451
    %v508 = vpack.c.b16 %v460, %v456
    %v509 = vpack.c.b16 %v461, %v457
    %v510 = vpack.c.b16 %v462, %v458
    %v511 = vpack.c.b16 %v463, %v459
    %v512 = vpack.c.b16 %v468, %v464
    %v513 = vpack.c.b16 %v469, %v465
    %v514 = vpack.c.b16 %v470, %v466
    %v515 = vpack.c.b16 %v471, %v467
    %v516 = vpack.c.b16 %v476, %v472
    %v517 = vpack.c.b16 %v477, %v473
    %v518 = vpack.c.b16 %v478, %v474
    %v519 = vpack.c.b16 %v479, %v475
    %v520 = vpack.c.b16 %v484, %v480
    %v521 = vpack.c.b16 %v485, %v481
    %v522 = vpack.c.b16 %v486, %v482
    %v523 = vpack.c.b16 %v487, %v483
    %v524 = vpack.c.b16 %v492, %v488
    %v525 = vpack.c.b16 %v493, %v489
    %v526 = vpack.c.b16 %v494, %v490
    %v527 = vpack.c.b16 %v495, %v491
    %560 = vmatprep.subr.bf16.mxu0 %v525
    %561 = vmatpush1.bf16.msra.mxu0 %v524
    %562 = vmatprep.subr.bf16.mxu0 %v521
    %563 = vmatpush1.bf16.msra.mxu0 %v520
    %564 = vmatprep.subr.bf16.mxu0 %v517
    %565 = vmatpush1.bf16.msra.mxu0 %v516
    %566 = vmatprep.subr.bf16.mxu0 %v513
    %567 = vmatpush1.bf16.msra.mxu0 %v512
    %568 = vmatprep.subr.bf16.mxu0 %v509
    %569 = vmatpush1.bf16.msra.mxu0 %v508
    %570 = vmatprep.subr.bf16.mxu0 %v505
    %571 = vmatpush1.bf16.msra.mxu0 %v504
    %572 = vmatprep.subr.bf16.mxu0 %v501
    %573 = vmatpush1.bf16.msra.mxu0 %v500
    %574 = vmatprep.subr.bf16.mxu0 %v497
    %575 = vmatpush1.bf16.msra.mxu0 %v496
    %576 = vmatprep.subr.bf16.mxu0 0
    %577 = vmatpush2.bf16.msra.mxu0 0
    %578 = vmatprep.subr.bf16.mxu0 0
    %579 = vmatpush2.bf16.msra.mxu0 0
    %580 = vmatprep.subr.bf16.mxu0 0
    %581 = vmatpush2.bf16.msra.mxu0 0
    %582 = vmatprep.subr.bf16.mxu0 0
    %583 = vmatpush2.bf16.msra.mxu0 0
    %584 = vmatprep.subr.bf16.mxu0 0
    %585 = vmatpush2.bf16.msra.mxu0 0
    %586 = vmatprep.subr.bf16.mxu0 0
    %587 = vmatpush2.bf16.msra.mxu0 0
    %588 = vmatprep.subr.bf16.mxu0 0
    %589 = vmatpush2.bf16.msra.mxu0 0
    %590 = vmatprep.subr.bf16.mxu0 0
    %591 = vmatpush2.bf16.msra.mxu0 0
    %592 = vmatprep.mubr.bf16.mxu0 0
    %593 = vmatmul.mubr.bf16.gmra.mxu0 %v367
    %v594 = vpop.f32.mrf.mxu0
    %v595 = vadd.f32 0.0, %v594
    %v596 = vpop.f32.mrf.mxu0
    %v597 = vadd.f32 0.0, %v596
    %v598 = vpop.f32.mrf.mxu0
    %v599 = vpop.f32.mrf.mxu0
    %600 = vdwg.mxu0
    %601 = vmatprep.subr.bf16.mxu0 %v527
    %602 = vmatpush1.bf16.msra.mxu0 %v526
    %603 = vmatprep.subr.bf16.mxu0 %v523
    %604 = vmatpush1.bf16.msra.mxu0 %v522
    %605 = vmatprep.subr.bf16.mxu0 %v519
    %606 = vmatpush1.bf16.msra.mxu0 %v518
    %607 = vmatprep.subr.bf16.mxu0 %v515
    %608 = vmatpush1.bf16.msra.mxu0 %v514
    %609 = vmatprep.subr.bf16.mxu0 %v511
    %610 = vmatpush1.bf16.msra.mxu0 %v510
    %611 = vmatprep.subr.bf16.mxu0 %v507
    %612 = vmatpush1.bf16.msra.mxu0 %v506
    %613 = vmatprep.subr.bf16.mxu0 %v503
    %614 = vmatpush1.bf16.msra.mxu0 %v502
    %615 = vmatprep.subr.bf16.mxu0 %v499
    %616 = vmatpush1.bf16.msra.mxu0 %v498
    %617 = vmatprep.subr.bf16.mxu0 0
    %618 = vmatpush2.bf16.msra.mxu0 0
    %619 = vmatprep.subr.bf16.mxu0 0
    %620 = vmatpush2.bf16.msra.mxu0 0
    %621 = vmatprep.subr.bf16.mxu0 0
    %622 = vmatpush2.bf16.msra.mxu0 0
    %623 = vmatprep.subr.bf16.mxu0 0
    %624 = vmatpush2.bf16.msra.mxu0 0
    %625 = vmatprep.subr.bf16.mxu0 0
    %626 = vmatpush2.bf16.msra.mxu0 0
    %627 = vmatprep.subr.bf16.mxu0 0
    %628 = vmatpush2.bf16.msra.mxu0 0
    %629 = vmatprep.subr.bf16.mxu0 0
    %630 = vmatpush2.bf16.msra.mxu0 0
    %631 = vmatprep.subr.bf16.mxu0 0
    %632 = vmatpush2.bf16.msra.mxu0 0
    %633 = vmatprep.mubr.bf16.mxu0 0
    %634 = vmatmul.mubr.bf16.gmra.mxu0 %v367
    %v635 = vpop.f32.mrf.mxu0
    %v636 = vadd.f32 0.0, %v635
    %v637 = vpop.f32.mrf.mxu0
    %v638 = vadd.f32 0.0, %v637
    %v639 = vpop.f32.mrf.mxu0
    %v640 = vpop.f32.mrf.mxu0
    %641 = vdwg.mxu0
    %v642 = vadd.f32 %v363, %v595
    %v643 = vadd.f32 %v364, %v597
    %v644 = vadd.f32 %v365, %v636
    %v645 = vadd.f32 %v366, %v638
    %v646 = vmul.f32 %v642, 0.5
    %v647 = vmul.f32 %v643, 0.5
    %v648 = vmul.f32 %v644, 0.5
    %v649 = vtanh.pop %v646
    %v650 = vtanh.pop %v647
    %v651 = vtanh.pop %v648
    %v652 = vmul.f32 %v649, 0.5
    %v653 = vmul.f32 %v650, 0.5
    %v654 = vmul.f32 %v651, 0.5
    %v655 = vadd.f32 %v652, 0.5
    %v656 = vadd.f32 %v653, 0.5
    %v657 = vadd.f32 %v654, 0.5
    %v658 = vtanh.pop %v645
    %v659 = vmul.f32 %v656, %v362
    %v660 = vmul.f32 %v655, %v658
    %v661 = vadd.f32 %v659, %v660
    %v662 = vtanh.pop %v661
    %v663 = vmul.f32 %v657, %v662
    %v664 = vld [vmem:[#allocation2 + $0x20] sm:$0xff]
    %v665 = vld [vmem:[#allocation2 + $0x28] sm:$0xff]
    %v666 = vld [vmem:[#allocation2 + $0x30] sm:$0xff]
    %v667 = vld [vmem:[#allocation2 + $0x38] sm:$0xff]
    %v668 = vpack.c.bf16 %v663, %v663
    %669 = vmatprep.subr.bf16.mxu0 %v525
    %670 = vmatpush1.bf16.msra.mxu0 %v524
    %671 = vmatprep.subr.bf16.mxu0 %v521
    %672 = vmatpush1.bf16.msra.mxu0 %v520
    %673 = vmatprep.subr.bf16.mxu0 %v517
    %674 = vmatpush1.bf16.msra.mxu0 %v516
    %675 = vmatprep.subr.bf16.mxu0 %v513
    %676 = vmatpush1.bf16.msra.mxu0 %v512
    %677 = vmatprep.subr.bf16.mxu0 %v509
    %678 = vmatpush1.bf16.msra.mxu0 %v508
    %679 = vmatprep.subr.bf16.mxu0 %v505
    %680 = vmatpush1.bf16.msra.mxu0 %v504
    %681 = vmatprep.subr.bf16.mxu0 %v501
    %682 = vmatpush1.bf16.msra.mxu0 %v500
    %683 = vmatprep.subr.bf16.mxu0 %v497
    %684 = vmatpush1.bf16.msra.mxu0 %v496
    %685 = vmatprep.subr.bf16.mxu0 0
    %686 = vmatpush2.bf16.msra.mxu0 0
    %687 = vmatprep.subr.bf16.mxu0 0
    %688 = vmatpush2.bf16.msra.mxu0 0
    %689 = vmatprep.subr.bf16.mxu0 0
    %690 = vmatpush2.bf16.msra.mxu0 0
    %691 = vmatprep.subr.bf16.mxu0 0
    %692 = vmatpush2.bf16.msra.mxu0 0
    %693 = vmatprep.subr.bf16.mxu0 0
    %694 = vmatpush2.bf16.msra.mxu0 0
    %695 = vmatprep.subr.bf16.mxu0 0
    %696 = vmatpush2.bf16.msra.mxu0 0
    %697 = vmatprep.subr.bf16.mxu0 0
    %698 = vmatpush2.bf16.msra.mxu0 0
    %699 = vmatprep.subr.bf16.mxu0 0
    %700 = vmatpush2.bf16.msra.mxu0 0
    %701 = vmatprep.mubr.bf16.mxu0 0
    %702 = vmatmul.mubr.bf16.gmra.mxu0 %v668
    %v703 = vpop.f32.mrf.mxu0
    %v704 = vadd.f32 0.0, %v703
    %v705 = vpop.f32.mrf.mxu0
    %v706 = vadd.f32 0.0, %v705
    %v707 = vpop.f32.mrf.mxu0
    %v708 = vpop.f32.mrf.mxu0
    %709 = vdwg.mxu0
    %710 = vmatprep.subr.bf16.mxu0 %v527
    %711 = vmatpush1.bf16.msra.mxu0 %v526
    %712 = vmatprep.subr.bf16.mxu0 %v523
    %713 = vmatpush1.bf16.msra.mxu0 %v522
    %714 = vmatprep.subr.bf16.mxu0 %v519
    %715 = vmatpush1.bf16.msra.mxu0 %v518
    %716 = vmatprep.subr.bf16.mxu0 %v515
    %717 = vmatpush1.bf16.msra.mxu0 %v514
    %718 = vmatprep.subr.bf16.mxu0 %v511
    %719 = vmatpush1.bf16.msra.mxu0 %v510
    %720 = vmatprep.subr.bf16.mxu0 %v507
    %721 = vmatpush1.bf16.msra.mxu0 %v506
    %722 = vmatprep.subr.bf16.mxu0 %v503
    %723 = vmatpush1.bf16.msra.mxu0 %v502
    %724 = vmatprep.subr.bf16.mxu0 %v499
    %725 = vmatpush1.bf16.msra.mxu0 %v498
    %726 = vmatprep.subr.bf16.mxu0 0
    %727 = vmatpush2.bf16.msra.mxu0 0
    %728 = vmatprep.subr.bf16.mxu0 0
    %729 = vmatpush2.bf16.msra.mxu0 0
    %730 = vmatprep.subr.bf16.mxu0 0
    %731 = vmatpush2.bf16.msra.mxu0 0
    %732 = vmatprep.subr.bf16.mxu0 0
    %733 = vmatpush2.bf16.msra.mxu0 0
    %734 = vmatprep.subr.bf16.mxu0 0
    %735 = vmatpush2.bf16.msra.mxu0 0
    %736 = vmatprep.subr.bf16.mxu0 0
    %737 = vmatpush2.bf16.msra.mxu0 0
    %738 = vmatprep.subr.bf16.mxu0 0
    %739 = vmatpush2.bf16.msra.mxu0 0
    %740 = vmatprep.subr.bf16.mxu0 0
    %741 = vmatpush2.bf16.msra.mxu0 0
    %742 = vmatprep.mubr.bf16.mxu0 0
    %743 = vmatmul.mubr.bf16.gmra.mxu0 %v668
    %v744 = vpop.f32.mrf.mxu0
    %v745 = vadd.f32 0.0, %v744
    %v746 = vpop.f32.mrf.mxu0
    %v747 = vadd.f32 0.0, %v746
    %v748 = vpop.f32.mrf.mxu0
    %v749 = vpop.f32.mrf.mxu0
    %750 = vdwg.mxu0
    %v751 = vadd.f32 %v664, %v704
    %v752 = vadd.f32 %v665, %v706
    %v753 = vadd.f32 %v666, %v745
    %v754 = vadd.f32 %v667, %v747
    %v755 = vmul.f32 %v751, 0.5
    %v756 = vmul.f32 %v752, 0.5
    %v757 = vmul.f32 %v753, 0.5
    %v758 = vtanh.pop %v755
    %v759 = vtanh.pop %v756
    %v760 = vtanh.pop %v757
    %v761 = vmul.f32 %v758, 0.5
    %v762 = vmul.f32 %v759, 0.5
    %v763 = vmul.f32 %v760, 0.5
    %v764 = vadd.f32 %v761, 0.5
    %v765 = vadd.f32 %v762, 0.5
    %v766 = vadd.f32 %v763, 0.5
    %v767 = vtanh.pop %v754
    %v768 = vmul.f32 %v765, %v661
    %v769 = vmul.f32 %v764, %v767
    %v770 = vadd.f32 %v768, %v769
    %v771 = vtanh.pop %v770
    %v772 = vmul.f32 %v766, %v771
    %v773 = vld [vmem:[#allocation2 + $0x40] sm:$0xff]
    %v774 = vld [vmem:[#allocation2 + $0x48] sm:$0xff]
    %v775 = vld [vmem:[#allocation2 + $0x50] sm:$0xff]
    %v776 = vld [vmem:[#allocation2 + $0x58] sm:$0xff]
    %v777 = vpack.c.bf16 %v772, %v772
    %778 = vmatprep.subr.bf16.mxu0 %v525
    %779 = vmatpush1.bf16.msra.mxu0 %v524
    %780 = vmatprep.subr.bf16.mxu0 %v521
    %781 = vmatpush1.bf16.msra.mxu0 %v520
    %782 = vmatprep.subr.bf16.mxu0 %v517
    %783 = vmatpush1.bf16.msra.mxu0 %v516
    %784 = vmatprep.subr.bf16.mxu0 %v513
    %785 = vmatpush1.bf16.msra.mxu0 %v512
    %786 = vmatprep.subr.bf16.mxu0 %v509
    %787 = vmatpush1.bf16.msra.mxu0 %v508
    %788 = vmatprep.subr.bf16.mxu0 %v505
    %789 = vmatpush1.bf16.msra.mxu0 %v504
    %790 = vmatprep.subr.bf16.mxu0 %v501
    %791 = vmatpush1.bf16.msra.mxu0 %v500
    %792 = vmatprep.subr.bf16.mxu0 %v497
    %793 = vmatpush1.bf16.msra.mxu0 %v496
    %794 = vmatprep.subr.bf16.mxu0 0
    %795 = vmatpush2.bf16.msra.mxu0 0
    %796 = vmatprep.subr.bf16.mxu0 0
    %797 = vmatpush2.bf16.msra.mxu0 0
    %798 = vmatprep.subr.bf16.mxu0 0
    %799 = vmatpush2.bf16.msra.mxu0 0
    %800 = vmatprep.subr.bf16.mxu0 0
    %801 = vmatpush2.bf16.msra.mxu0 0
    %802 = vmatprep.subr.bf16.mxu0 0
    %803 = vmatpush2.bf16.msra.mxu0 0
    %804 = vmatprep.subr.bf16.mxu0 0
    %805 = vmatpush2.bf16.msra.mxu0 0
    %806 = vmatprep.subr.bf16.mxu0 0
    %807 = vmatpush2.bf16.msra.mxu0 0
    %808 = vmatprep.subr.bf16.mxu0 0
    %809 = vmatpush2.bf16.msra.mxu0 0
    %810 = vmatprep.mubr.bf16.mxu0 0
    %811 = vmatmul.mubr.bf16.gmra.mxu0 %v777
    %v812 = vpop.f32.mrf.mxu0
    %v813 = vadd.f32 0.0, %v812
    %v814 = vpop.f32.mrf.mxu0
    %v815 = vadd.f32 0.0, %v814
    %v816 = vpop.f32.mrf.mxu0
    %v817 = vpop.f32.mrf.mxu0
    %818 = vdwg.mxu0
    %819 = vmatprep.subr.bf16.mxu0 %v527
    %820 = vmatpush1.bf16.msra.mxu0 %v526
    %821 = vmatprep.subr.bf16.mxu0 %v523
    %822 = vmatpush1.bf16.msra.mxu0 %v522
    %823 = vmatprep.subr.bf16.mxu0 %v519
    %824 = vmatpush1.bf16.msra.mxu0 %v518
    %825 = vmatprep.subr.bf16.mxu0 %v515
    %826 = vmatpush1.bf16.msra.mxu0 %v514
    %827 = vmatprep.subr.bf16.mxu0 %v511
    %828 = vmatpush1.bf16.msra.mxu0 %v510
    %829 = vmatprep.subr.bf16.mxu0 %v507
    %830 = vmatpush1.bf16.msra.mxu0 %v506
    %831 = vmatprep.subr.bf16.mxu0 %v503
    %832 = vmatpush1.bf16.msra.mxu0 %v502
    %833 = vmatprep.subr.bf16.mxu0 %v499
    %834 = vmatpush1.bf16.msra.mxu0 %v498
    %835 = vmatprep.subr.bf16.mxu0 0
    %836 = vmatpush2.bf16.msra.mxu0 0
    %837 = vmatprep.subr.bf16.mxu0 0
    %838 = vmatpush2.bf16.msra.mxu0 0
    %839 = vmatprep.subr.bf16.mxu0 0
    %840 = vmatpush2.bf16.msra.mxu0 0
    %841 = vmatprep.subr.bf16.mxu0 0
    %842 = vmatpush2.bf16.msra.mxu0 0
    %843 = vmatprep.subr.bf16.mxu0 0
    %844 = vmatpush2.bf16.msra.mxu0 0
    %845 = vmatprep.subr.bf16.mxu0 0
    %846 = vmatpush2.bf16.msra.mxu0 0
    %847 = vmatprep.subr.bf16.mxu0 0
    %848 = vmatpush2.bf16.msra.mxu0 0
    %849 = vmatprep.subr.bf16.mxu0 0
    %850 = vmatpush2.bf16.msra.mxu0 0
    %851 = vmatprep.mubr.bf16.mxu0 0
    %852 = vmatmul.mubr.bf16.gmra.mxu0 %v777
    %v853 = vpop.f32.mrf.mxu0
    %v854 = vadd.f32 0.0, %v853
    %v855 = vpop.f32.mrf.mxu0
    %v856 = vadd.f32 0.0, %v855
    %v857 = vpop.f32.mrf.mxu0
    %v858 = vpop.f32.mrf.mxu0
    %859 = vdwg.mxu0
    %v860 = vadd.f32 %v773, %v813
    %v861 = vadd.f32 %v774, %v815
    %v862 = vadd.f32 %v775, %v854
    %v863 = vadd.f32 %v776, %v856
    %v864 = vmul.f32 %v860, 0.5
    %v865 = vmul.f32 %v861, 0.5
    %v866 = vmul.f32 %v862, 0.5
    %v867 = vtanh.pop %v864
    %v868 = vtanh.pop %v865
    %v869 = vtanh.pop %v866
    %v870 = vmul.f32 %v867, 0.5
    %v871 = vmul.f32 %v868, 0.5
    %v872 = vmul.f32 %v869, 0.5
    %v873 = vadd.f32 %v870, 0.5
    %v874 = vadd.f32 %v871, 0.5
    %v875 = vadd.f32 %v872, 0.5
    %v876 = vtanh.pop %v863
    %v877 = vmul.f32 %v874, %v770
    %v878 = vmul.f32 %v873, %v876
    %v879 = vadd.f32 %v877, %v878
    %v880 = vtanh.pop %v879
    %v881 = vmul.f32 %v875, %v880
    %v882 = vld [vmem:[#allocation2 + $0x60] sm:$0xff]
    %v883 = vld [vmem:[#allocation2 + $0x68] sm:$0xff]
    %v884 = vld [vmem:[#allocation2 + $0x70] sm:$0xff]
    %v885 = vld [vmem:[#allocation2 + $0x78] sm:$0xff]
    %v886 = vpack.c.bf16 %v881, %v881
    %887 = vmatprep.subr.bf16.mxu0 %v525
    %888 = vmatpush1.bf16.msra.mxu0 %v524
    %889 = vmatprep.subr.bf16.mxu0 %v521
    %890 = vmatpush1.bf16.msra.mxu0 %v520
    %891 = vmatprep.subr.bf16.mxu0 %v517
    %892 = vmatpush1.bf16.msra.mxu0 %v516
    %893 = vmatprep.subr.bf16.mxu0 %v513
    %894 = vmatpush1.bf16.msra.mxu0 %v512
    %895 = vmatprep.subr.bf16.mxu0 %v509
    %896 = vmatpush1.bf16.msra.mxu0 %v508
    %897 = vmatprep.subr.bf16.mxu0 %v505
    %898 = vmatpush1.bf16.msra.mxu0 %v504
    %899 = vmatprep.subr.bf16.mxu0 %v501
    %900 = vmatpush1.bf16.msra.mxu0 %v500
    %901 = vmatprep.subr.bf16.mxu0 %v497
    %902 = vmatpush1.bf16.msra.mxu0 %v496
    %903 = vmatprep.subr.bf16.mxu0 0
    %904 = vmatpush2.bf16.msra.mxu0 0
    %905 = vmatprep.subr.bf16.mxu0 0
    %906 = vmatpush2.bf16.msra.mxu0 0
    %907 = vmatprep.subr.bf16.mxu0 0
    %908 = vmatpush2.bf16.msra.mxu0 0
    %909 = vmatprep.subr.bf16.mxu0 0
    %910 = vmatpush2.bf16.msra.mxu0 0
    %911 = vmatprep.subr.bf16.mxu0 0
    %912 = vmatpush2.bf16.msra.mxu0 0
    %913 = vmatprep.subr.bf16.mxu0 0
    %914 = vmatpush2.bf16.msra.mxu0 0
    %915 = vmatprep.subr.bf16.mxu0 0
    %916 = vmatpush2.bf16.msra.mxu0 0
    %917 = vmatprep.subr.bf16.mxu0 0
    %918 = vmatpush2.bf16.msra.mxu0 0
    %919 = vmatprep.mubr.bf16.mxu0 0
    %920 = vmatmul.mubr.bf16.gmra.mxu0 %v886
    %v921 = vpop.f32.mrf.mxu0
    %v922 = vadd.f32 0.0, %v921
    %v923 = vpop.f32.mrf.mxu0
    %v924 = vadd.f32 0.0, %v923
    %v925 = vpop.f32.mrf.mxu0
    %v926 = vpop.f32.mrf.mxu0
    %927 = vdwg.mxu0
    %928 = vmatprep.subr.bf16.mxu0 %v527
    %929 = vmatpush1.bf16.msra.mxu0 %v526
    %930 = vmatprep.subr.bf16.mxu0 %v523
    %931 = vmatpush1.bf16.msra.mxu0 %v522
    %932 = vmatprep.subr.bf16.mxu0 %v519
    %933 = vmatpush1.bf16.msra.mxu0 %v518
    %934 = vmatprep.subr.bf16.mxu0 %v515
    %935 = vmatpush1.bf16.msra.mxu0 %v514
    %936 = vmatprep.subr.bf16.mxu0 %v511
    %937 = vmatpush1.bf16.msra.mxu0 %v510
    %938 = vmatprep.subr.bf16.mxu0 %v507
    %939 = vmatpush1.bf16.msra.mxu0 %v506
    %940 = vmatprep.subr.bf16.mxu0 %v503
    %941 = vmatpush1.bf16.msra.mxu0 %v502
    %942 = vmatprep.subr.bf16.mxu0 %v499
    %943 = vmatpush1.bf16.msra.mxu0 %v498
    %944 = vmatprep.subr.bf16.mxu0 0
    %945 = vmatpush2.bf16.msra.mxu0 0
    %946 = vmatprep.subr.bf16.mxu0 0
    %947 = vmatpush2.bf16.msra.mxu0 0
    %948 = vmatprep.subr.bf16.mxu0 0
    %949 = vmatpush2.bf16.msra.mxu0 0
    %950 = vmatprep.subr.bf16.mxu0 0
    %951 = vmatpush2.bf16.msra.mxu0 0
    %952 = vmatprep.subr.bf16.mxu0 0
    %953 = vmatpush2.bf16.msra.mxu0 0
    %954 = vmatprep.subr.bf16.mxu0 0
    %955 = vmatpush2.bf16.msra.mxu0 0
    %956 = vmatprep.subr.bf16.mxu0 0
    %957 = vmatpush2.bf16.msra.mxu0 0
    %958 = vmatprep.subr.bf16.mxu0 0
    %959 = vmatpush2.bf16.msra.mxu0 0
    %960 = vmatprep.mubr.bf16.mxu0 0
    %961 = vmatmul.mubr.bf16.gmra.mxu0 %v886
    %v962 = vpop.f32.mrf.mxu0
    %v963 = vadd.f32 0.0, %v962
    %v964 = vpop.f32.mrf.mxu0
    %v965 = vadd.f32 0.0, %v964
    %v966 = vpop.f32.mrf.mxu0
    %v967 = vpop.f32.mrf.mxu0
    %968 = vdwg.mxu0
    %v969 = vadd.f32 %v882, %v922
    %v970 = vadd.f32 %v883, %v924
    %v971 = vadd.f32 %v884, %v963
    %v972 = vadd.f32 %v885, %v965
    %v973 = vmul.f32 %v969, 0.5
    %v974 = vmul.f32 %v970, 0.5
    %v975 = vmul.f32 %v971, 0.5
    %v976 = vtanh.pop %v973
    %v977 = vtanh.pop %v974
    %v978 = vtanh.pop %v975
    %v979 = vmul.f32 %v976, 0.5
    %v980 = vmul.f32 %v977, 0.5
    %v981 = vmul.f32 %v978, 0.5
    %v982 = vadd.f32 %v979, 0.5
    %v983 = vadd.f32 %v980, 0.5
    %v984 = vadd.f32 %v981, 0.5
    %v985 = vtanh.pop %v972
    %v986 = vmul.f32 %v983, %v879
    %v987 = vmul.f32 %v982, %v985
    %v988 = vadd.f32 %v986, %v987
    %v989 = vtanh.pop %v988
    %v990 = vmul.f32 %v984, %v989
    %v991 = vld [vmem:[#allocation2 + $0x80] sm:$0xff]
    %v992 = vld [vmem:[#allocation2 + $0x88] sm:$0xff]
    %v993 = vld [vmem:[#allocation2 + $0x90] sm:$0xff]
    %v994 = vld [vmem:[#allocation2 + $0x98] sm:$0xff]
    %v995 = vpack.c.bf16 %v990, %v990
    %996 = vmatprep.subr.bf16.mxu0 %v525
    %997 = vmatpush1.bf16.msra.mxu0 %v524
    %998 = vmatprep.subr.bf16.mxu0 %v521
    %999 = vmatpush1.bf16.msra.mxu0 %v520
    %1000 = vmatprep.subr.bf16.mxu0 %v517
    %1001 = vmatpush1.bf16.msra.mxu0 %v516
    %1002 = vmatprep.subr.bf16.mxu0 %v513
    %1003 = vmatpush1.bf16.msra.mxu0 %v512
    %1004 = vmatprep.subr.bf16.mxu0 %v509
    %1005 = vmatpush1.bf16.msra.mxu0 %v508
    %1006 = vmatprep.subr.bf16.mxu0 %v505
    %1007 = vmatpush1.bf16.msra.mxu0 %v504
    %1008 = vmatprep.subr.bf16.mxu0 %v501
    %1009 = vmatpush1.bf16.msra.mxu0 %v500
    %1010 = vmatprep.subr.bf16.mxu0 %v497
    %1011 = vmatpush1.bf16.msra.mxu0 %v496
    %1012 = vmatprep.subr.bf16.mxu0 0
    %1013 = vmatpush2.bf16.msra.mxu0 0
    %1014 = vmatprep.subr.bf16.mxu0 0
    %1015 = vmatpush2.bf16.msra.mxu0 0
    %1016 = vmatprep.subr.bf16.mxu0 0
    %1017 = vmatpush2.bf16.msra.mxu0 0
    %1018 = vmatprep.subr.bf16.mxu0 0
    %1019 = vmatpush2.bf16.msra.mxu0 0
    %1020 = vmatprep.subr.bf16.mxu0 0
    %1021 = vmatpush2.bf16.msra.mxu0 0
    %1022 = vmatprep.subr.bf16.mxu0 0
    %1023 = vmatpush2.bf16.msra.mxu0 0
    %1024 = vmatprep.subr.bf16.mxu0 0
    %1025 = vmatpush2.bf16.msra.mxu0 0
    %1026 = vmatprep.subr.bf16.mxu0 0
    %1027 = vmatpush2.bf16.msra.mxu0 0
    %1028 = vmatprep.mubr.bf16.mxu0 0
    %1029 = vmatmul.mubr.bf16.gmra.mxu0 %v995
    %v1030 = vpop.f32.mrf.mxu0
    %v1031 = vadd.f32 0.0, %v1030
    %v1032 = vpop.f32.mrf.mxu0
    %v1033 = vadd.f32 0.0, %v1032
    %v1034 = vpop.f32.mrf.mxu0
    %v1035 = vpop.f32.mrf.mxu0
    %1036 = vdwg.mxu0
    %1037 = vmatprep.subr.bf16.mxu0 %v527
    %1038 = vmatpush1.bf16.msra.mxu0 %v526
    %1039 = vmatprep.subr.bf16.mxu0 %v523
    %1040 = vmatpush1.bf16.msra.mxu0 %v522
    %1041 = vmatprep.subr.bf16.mxu0 %v519
    %1042 = vmatpush1.bf16.msra.mxu0 %v518
    %1043 = vmatprep.subr.bf16.mxu0 %v515
    %1044 = vmatpush1.bf16.msra.mxu0 %v514
    %1045 = vmatprep.subr.bf16.mxu0 %v511
    %1046 = vmatpush1.bf16.msra.mxu0 %v510
    %1047 = vmatprep.subr.bf16.mxu0 %v507
    %1048 = vmatpush1.bf16.msra.mxu0 %v506
    %1049 = vmatprep.subr.bf16.mxu0 %v503
    %1050 = vmatpush1.bf16.msra.mxu0 %v502
    %1051 = vmatprep.subr.bf16.mxu0 %v499
    %1052 = vmatpush1.bf16.msra.mxu0 %v498
    %1053 = vmatprep.subr.bf16.mxu0 0
    %1054 = vmatpush2.bf16.msra.mxu0 0
    %1055 = vmatprep.subr.bf16.mxu0 0
    %1056 = vmatpush2.bf16.msra.mxu0 0
    %1057 = vmatprep.subr.bf16.mxu0 0
    %1058 = vmatpush2.bf16.msra.mxu0 0
    %1059 = vmatprep.subr.bf16.mxu0 0
    %1060 = vmatpush2.bf16.msra.mxu0 0
    %1061 = vmatprep.subr.bf16.mxu0 0
    %1062 = vmatpush2.bf16.msra.mxu0 0
    %1063 = vmatprep.subr.bf16.mxu0 0
    %1064 = vmatpush2.bf16.msra.mxu0 0
    %1065 = vmatprep.subr.bf16.mxu0 0
    %1066 = vmatpush2.bf16.msra.mxu0 0
    %1067 = vmatprep.subr.bf16.mxu0 0
    %1068 = vmatpush2.bf16.msra.mxu0 0
    %1069 = vmatprep.mubr.bf16.mxu0 0
    %1070 = vmatmul.mubr.bf16.gmra.mxu0 %v995
    %v1071 = vpop.f32.mrf.mxu0
    %v1072 = vadd.f32 0.0, %v1071
    %v1073 = vpop.f32.mrf.mxu0
    %v1074 = vadd.f32 0.0, %v1073
    %v1075 = vpop.f32.mrf.mxu0
    %v1076 = vpop.f32.mrf.mxu0
    %1077 = vdwg.mxu0
    %v1078 = vadd.f32 %v991, %v1031
    %v1079 = vadd.f32 %v992, %v1033
    %v1080 = vadd.f32 %v993, %v1072
    %v1081 = vadd.f32 %v994, %v1074
    %v1082 = vmul.f32 %v1078, 0.5
    %v1083 = vmul.f32 %v1079, 0.5
    %v1084 = vmul.f32 %v1080, 0.5
    %v1085 = vtanh.pop %v1082
    %v1086 = vtanh.pop %v1083
    %v1087 = vtanh.pop %v1084
    %v1088 = vmul.f32 %v1085, 0.5
    %v1089 = vmul.f32 %v1086, 0.5
    %v1090 = vmul.f32 %v1087, 0.5
    %v1091 = vadd.f32 %v1088, 0.5
    %v1092 = vadd.f32 %v1089, 0.5
    %v1093 = vadd.f32 %v1090, 0.5
    %v1094 = vtanh.pop %v1081
    %v1095 = vmul.f32 %v1092, %v988
    %v1096 = vmul.f32 %v1091, %v1094
    %v1097 = vadd.f32 %v1095, %v1096
    %v1098 = vtanh.pop %v1097
    %v1099 = vmul.f32 %v1093, %v1098
    %v1100 = vld [vmem:[#allocation2 + $0xa0] sm:$0xff]
    %v1101 = vld [vmem:[#allocation2 + $0xa8] sm:$0xff]
    %v1102 = vld [vmem:[#allocation2 + $0xb0] sm:$0xff]
    %v1103 = vld [vmem:[#allocation2 + $0xb8] sm:$0xff]
    %v1104 = vpack.c.bf16 %v1099, %v1099
    %1105 = vmatprep.subr.bf16.mxu0 %v525
    %1106 = vmatpush1.bf16.msra.mxu0 %v524
    %1107 = vmatprep.subr.bf16.mxu0 %v521
    %1108 = vmatpush1.bf16.msra.mxu0 %v520
    %1109 = vmatprep.subr.bf16.mxu0 %v517
    %1110 = vmatpush1.bf16.msra.mxu0 %v516
    %1111 = vmatprep.subr.bf16.mxu0 %v513
    %1112 = vmatpush1.bf16.msra.mxu0 %v512
    %1113 = vmatprep.subr.bf16.mxu0 %v509
    %1114 = vmatpush1.bf16.msra.mxu0 %v508
    %1115 = vmatprep.subr.bf16.mxu0 %v505
    %1116 = vmatpush1.bf16.msra.mxu0 %v504
    %1117 = vmatprep.subr.bf16.mxu0 %v501
    %1118 = vmatpush1.bf16.msra.mxu0 %v500
    %1119 = vmatprep.subr.bf16.mxu0 %v497
    %1120 = vmatpush1.bf16.msra.mxu0 %v496
    %1121 = vmatprep.subr.bf16.mxu0 0
    %1122 = vmatpush2.bf16.msra.mxu0 0
    %1123 = vmatprep.subr.bf16.mxu0 0
    %1124 = vmatpush2.bf16.msra.mxu0 0
    %1125 = vmatprep.subr.bf16.mxu0 0
    %1126 = vmatpush2.bf16.msra.mxu0 0
    %1127 = vmatprep.subr.bf16.mxu0 0
    %1128 = vmatpush2.bf16.msra.mxu0 0
    %1129 = vmatprep.subr.bf16.mxu0 0
    %1130 = vmatpush2.bf16.msra.mxu0 0
    %1131 = vmatprep.subr.bf16.mxu0 0
    %1132 = vmatpush2.bf16.msra.mxu0 0
    %1133 = vmatprep.subr.bf16.mxu0 0
    %1134 = vmatpush2.bf16.msra.mxu0 0
    %1135 = vmatprep.subr.bf16.mxu0 0
    %1136 = vmatpush2.bf16.msra.mxu0 0
    %1137 = vmatprep.mubr.bf16.mxu0 0
    %1138 = vmatmul.mubr.bf16.gmra.mxu0 %v1104
    %v1139 = vpop.f32.mrf.mxu0
    %v1140 = vadd.f32 0.0, %v1139
    %v1141 = vpop.f32.mrf.mxu0
    %v1142 = vadd.f32 0.0, %v1141
    %v1143 = vpop.f32.mrf.mxu0
    %v1144 = vpop.f32.mrf.mxu0
    %1145 = vdwg.mxu0
    %1146 = vmatprep.subr.bf16.mxu0 %v527
    %1147 = vmatpush1.bf16.msra.mxu0 %v526
    %1148 = vmatprep.subr.bf16.mxu0 %v523
    %1149 = vmatpush1.bf16.msra.mxu0 %v522
    %1150 = vmatprep.subr.bf16.mxu0 %v519
    %1151 = vmatpush1.bf16.msra.mxu0 %v518
    %1152 = vmatprep.subr.bf16.mxu0 %v515
    %1153 = vmatpush1.bf16.msra.mxu0 %v514
    %1154 = vmatprep.subr.bf16.mxu0 %v511
    %1155 = vmatpush1.bf16.msra.mxu0 %v510
    %1156 = vmatprep.subr.bf16.mxu0 %v507
    %1157 = vmatpush1.bf16.msra.mxu0 %v506
    %1158 = vmatprep.subr.bf16.mxu0 %v503
    %1159 = vmatpush1.bf16.msra.mxu0 %v502
    %1160 = vmatprep.subr.bf16.mxu0 %v499
    %1161 = vmatpush1.bf16.msra.mxu0 %v498
    %1162 = vmatprep.subr.bf16.mxu0 0
    %1163 = vmatpush2.bf16.msra.mxu0 0
    %1164 = vmatprep.subr.bf16.mxu0 0
    %1165 = vmatpush2.bf16.msra.mxu0 0
    %1166 = vmatprep.subr.bf16.mxu0 0
    %1167 = vmatpush2.bf16.msra.mxu0 0
    %1168 = vmatprep.subr.bf16.mxu0 0
    %1169 = vmatpush2.bf16.msra.mxu0 0
    %1170 = vmatprep.subr.bf16.mxu0 0
    %1171 = vmatpush2.bf16.msra.mxu0 0
    %1172 = vmatprep.subr.bf16.mxu0 0
    %1173 = vmatpush2.bf16.msra.mxu0 0
    %1174 = vmatprep.subr.bf16.mxu0 0
    %1175 = vmatpush2.bf16.msra.mxu0 0
    %1176 = vmatprep.subr.bf16.mxu0 0
    %1177 = vmatpush2.bf16.msra.mxu0 0
    %1178 = vmatprep.mubr.bf16.mxu0 0
    %1179 = vmatmul.mubr.bf16.gmra.mxu0 %v1104
    %v1180 = vpop.f32.mrf.mxu0
    %v1181 = vadd.f32 0.0, %v1180
    %v1182 = vpop.f32.mrf.mxu0
    %v1183 = vadd.f32 0.0, %v1182
    %v1184 = vpop.f32.mrf.mxu0
    %v1185 = vpop.f32.mrf.mxu0
    %1186 = vdwg.mxu0
    %v1187 = vadd.f32 %v1100, %v1140
    %v1188 = vadd.f32 %v1101, %v1142
    %v1189 = vadd.f32 %v1102, %v1181
    %v1190 = vadd.f32 %v1103, %v1183
    %v1191 = vmul.f32 %v1187, 0.5
    %v1192 = vmul.f32 %v1188, 0.5
    %v1193 = vmul.f32 %v1189, 0.5
    %v1194 = vtanh.pop %v1191
    %v1195 = vtanh.pop %v1192
    %v1196 = vtanh.pop %v1193
    %v1197 = vmul.f32 %v1194, 0.5
    %v1198 = vmul.f32 %v1195, 0.5
    %v1199 = vmul.f32 %v1196, 0.5
    %v1200 = vadd.f32 %v1197, 0.5
    %v1201 = vadd.f32 %v1198, 0.5
    %v1202 = vadd.f32 %v1199, 0.5
    %v1203 = vtanh.pop %v1190
    %v1204 = vmul.f32 %v1201, %v1097
    %v1205 = vmul.f32 %v1200, %v1203
    %v1206 = vadd.f32 %v1204, %v1205
    %v1207 = vtanh.pop %v1206
    %v1208 = vmul.f32 %v1202, %v1207
    %v1209 = vld [vmem:[#allocation2 + $0xc0] sm:$0xff]
    %v1210 = vld [vmem:[#allocation2 + $0xc8] sm:$0xff]
    %v1211 = vld [vmem:[#allocation2 + $0xd0] sm:$0xff]
    %v1212 = vld [vmem:[#allocation2 + $0xd8] sm:$0xff]
    %v1213 = vpack.c.bf16 %v1208, %v1208
    %1214 = vmatprep.subr.bf16.mxu0 %v525
    %1215 = vmatpush1.bf16.msra.mxu0 %v524
    %1216 = vmatprep.subr.bf16.mxu0 %v521
    %1217 = vmatpush1.bf16.msra.mxu0 %v520
    %1218 = vmatprep.subr.bf16.mxu0 %v517
    %1219 = vmatpush1.bf16.msra.mxu0 %v516
    %1220 = vmatprep.subr.bf16.mxu0 %v513
    %1221 = vmatpush1.bf16.msra.mxu0 %v512
    %1222 = vmatprep.subr.bf16.mxu0 %v509
    %1223 = vmatpush1.bf16.msra.mxu0 %v508
    %1224 = vmatprep.subr.bf16.mxu0 %v505
    %1225 = vmatpush1.bf16.msra.mxu0 %v504
    %1226 = vmatprep.subr.bf16.mxu0 %v501
    %1227 = vmatpush1.bf16.msra.mxu0 %v500
    %1228 = vmatprep.subr.bf16.mxu0 %v497
    %1229 = vmatpush1.bf16.msra.mxu0 %v496
    %1230 = vmatprep.subr.bf16.mxu0 0
    %1231 = vmatpush2.bf16.msra.mxu0 0
    %1232 = vmatprep.subr.bf16.mxu0 0
    %1233 = vmatpush2.bf16.msra.mxu0 0
    %1234 = vmatprep.subr.bf16.mxu0 0
    %1235 = vmatpush2.bf16.msra.mxu0 0
    %1236 = vmatprep.subr.bf16.mxu0 0
    %1237 = vmatpush2.bf16.msra.mxu0 0
    %1238 = vmatprep.subr.bf16.mxu0 0
    %1239 = vmatpush2.bf16.msra.mxu0 0
    %1240 = vmatprep.subr.bf16.mxu0 0
    %1241 = vmatpush2.bf16.msra.mxu0 0
    %1242 = vmatprep.subr.bf16.mxu0 0
    %1243 = vmatpush2.bf16.msra.mxu0 0
    %1244 = vmatprep.subr.bf16.mxu0 0
    %1245 = vmatpush2.bf16.msra.mxu0 0
    %1246 = vmatprep.mubr.bf16.mxu0 0
    %1247 = vmatmul.mubr.bf16.gmra.mxu0 %v1213
    %v1248 = vpop.f32.mrf.mxu0
    %v1249 = vadd.f32 0.0, %v1248
    %v1250 = vpop.f32.mrf.mxu0
    %v1251 = vadd.f32 0.0, %v1250
    %v1252 = vpop.f32.mrf.mxu0
    %v1253 = vpop.f32.mrf.mxu0
    %1254 = vdwg.mxu0
    %1255 = vmatprep.subr.bf16.mxu0 %v527
    %1256 = vmatpush1.bf16.msra.mxu0 %v526
    %1257 = vmatprep.subr.bf16.mxu0 %v523
    %1258 = vmatpush1.bf16.msra.mxu0 %v522
    %1259 = vmatprep.subr.bf16.mxu0 %v519
    %1260 = vmatpush1.bf16.msra.mxu0 %v518
    %1261 = vmatprep.subr.bf16.mxu0 %v515
    %1262 = vmatpush1.bf16.msra.mxu0 %v514
    %1263 = vmatprep.subr.bf16.mxu0 %v511
    %1264 = vmatpush1.bf16.msra.mxu0 %v510
    %1265 = vmatprep.subr.bf16.mxu0 %v507
    %1266 = vmatpush1.bf16.msra.mxu0 %v506
    %1267 = vmatprep.subr.bf16.mxu0 %v503
    %1268 = vmatpush1.bf16.msra.mxu0 %v502
    %1269 = vmatprep.subr.bf16.mxu0 %v499
    %1270 = vmatpush1.bf16.msra.mxu0 %v498
    %1271 = vmatprep.subr.bf16.mxu0 0
    %1272 = vmatpush2.bf16.msra.mxu0 0
    %1273 = vmatprep.subr.bf16.mxu0 0
    %1274 = vmatpush2.bf16.msra.mxu0 0
    %1275 = vmatprep.subr.bf16.mxu0 0
    %1276 = vmatpush2.bf16.msra.mxu0 0
    %1277 = vmatprep.subr.bf16.mxu0 0
    %1278 = vmatpush2.bf16.msra.mxu0 0
    %1279 = vmatprep.subr.bf16.mxu0 0
    %1280 = vmatpush2.bf16.msra.mxu0 0
    %1281 = vmatprep.subr.bf16.mxu0 0
    %1282 = vmatpush2.bf16.msra.mxu0 0
    %1283 = vmatprep.subr.bf16.mxu0 0
    %1284 = vmatpush2.bf16.msra.mxu0 0
    %1285 = vmatprep.subr.bf16.mxu0 0
    %1286 = vmatpush2.bf16.msra.mxu0 0
    %1287 = vmatprep.mubr.bf16.mxu0 0
    %1288 = vmatmul.mubr.bf16.gmra.mxu0 %v1213
    %v1289 = vpop.f32.mrf.mxu0
    %v1290 = vadd.f32 0.0, %v1289
    %v1291 = vpop.f32.mrf.mxu0
    %v1292 = vadd.f32 0.0, %v1291
    %v1293 = vpop.f32.mrf.mxu0
    %v1294 = vpop.f32.mrf.mxu0
    %1295 = vdwg.mxu0
    %v1296 = vadd.f32 %v1209, %v1249
    %v1297 = vadd.f32 %v1210, %v1251
    %v1298 = vadd.f32 %v1211, %v1290
    %v1299 = vadd.f32 %v1212, %v1292
    %v1300 = vmul.f32 %v1296, 0.5
    %v1301 = vmul.f32 %v1297, 0.5
    %v1302 = vmul.f32 %v1298, 0.5
    %v1303 = vtanh.pop %v1300
    %v1304 = vtanh.pop %v1301
    %v1305 = vtanh.pop %v1302
    %v1306 = vmul.f32 %v1303, 0.5
    %v1307 = vmul.f32 %v1304, 0.5
    %v1308 = vmul.f32 %v1305, 0.5
    %v1309 = vadd.f32 %v1306, 0.5
    %v1310 = vadd.f32 %v1307, 0.5
    %v1311 = vadd.f32 %v1308, 0.5
    %v1312 = vtanh.pop %v1299
    %v1313 = vmul.f32 %v1310, %v1206
    %v1314 = vmul.f32 %v1309, %v1312
    %v1315 = vadd.f32 %v1313, %v1314
    %v1316 = vtanh.pop %v1315
    %v1317 = vmul.f32 %v1311, %v1316
    %v1318 = vld [vmem:[#allocation2 + $0xe0] sm:$0xff]
    %v1319 = vld [vmem:[#allocation2 + $0xe8] sm:$0xff]
    %v1320 = vld [vmem:[#allocation2 + $0xf0] sm:$0xff]
    %v1321 = vld [vmem:[#allocation2 + $0xf8] sm:$0xff]
    %v1322 = vpack.c.bf16 %v1317, %v1317
    %1323 = vmatprep.subr.bf16.mxu0 %v525
    %1324 = vmatpush1.bf16.msra.mxu0 %v524
    %1325 = vmatprep.subr.bf16.mxu0 %v521
    %1326 = vmatpush1.bf16.msra.mxu0 %v520
    %1327 = vmatprep.subr.bf16.mxu0 %v517
    %1328 = vmatpush1.bf16.msra.mxu0 %v516
    %1329 = vmatprep.subr.bf16.mxu0 %v513
    %1330 = vmatpush1.bf16.msra.mxu0 %v512
    %1331 = vmatprep.subr.bf16.mxu0 %v509
    %1332 = vmatpush1.bf16.msra.mxu0 %v508
    %1333 = vmatprep.subr.bf16.mxu0 %v505
    %1334 = vmatpush1.bf16.msra.mxu0 %v504
    %1335 = vmatprep.subr.bf16.mxu0 %v501
    %1336 = vmatpush1.bf16.msra.mxu0 %v500
    %1337 = vmatprep.subr.bf16.mxu0 %v497
    %1338 = vmatpush1.bf16.msra.mxu0 %v496
    %1339 = vmatprep.subr.bf16.mxu0 0
    %1340 = vmatpush2.bf16.msra.mxu0 0
    %1341 = vmatprep.subr.bf16.mxu0 0
    %1342 = vmatpush2.bf16.msra.mxu0 0
    %1343 = vmatprep.subr.bf16.mxu0 0
    %1344 = vmatpush2.bf16.msra.mxu0 0
    %1345 = vmatprep.subr.bf16.mxu0 0
    %1346 = vmatpush2.bf16.msra.mxu0 0
    %1347 = vmatprep.subr.bf16.mxu0 0
    %1348 = vmatpush2.bf16.msra.mxu0 0
    %1349 = vmatprep.subr.bf16.mxu0 0
    %1350 = vmatpush2.bf16.msra.mxu0 0
    %1351 = vmatprep.subr.bf16.mxu0 0
    %1352 = vmatpush2.bf16.msra.mxu0 0
    %1353 = vmatprep.subr.bf16.mxu0 0
    %1354 = vmatpush2.bf16.msra.mxu0 0
    %1355 = vmatprep.mubr.bf16.mxu0 0
    %1356 = vmatmul.mubr.bf16.gmra.mxu0 %v1322
    %v1357 = vpop.f32.mrf.mxu0
    %v1358 = vadd.f32 0.0, %v1357
    %v1359 = vpop.f32.mrf.mxu0
    %v1360 = vadd.f32 0.0, %v1359
    %v1361 = vpop.f32.mrf.mxu0
    %v1362 = vpop.f32.mrf.mxu0
    %1363 = vdwg.mxu0
    %1364 = vmatprep.subr.bf16.mxu0 %v527
    %1365 = vmatpush1.bf16.msra.mxu0 %v526
    %1366 = vmatprep.subr.bf16.mxu0 %v523
    %1367 = vmatpush1.bf16.msra.mxu0 %v522
    %1368 = vmatprep.subr.bf16.mxu0 %v519
    %1369 = vmatpush1.bf16.msra.mxu0 %v518
    %1370 = vmatprep.subr.bf16.mxu0 %v515
    %1371 = vmatpush1.bf16.msra.mxu0 %v514
    %1372 = vmatprep.subr.bf16.mxu0 %v511
    %1373 = vmatpush1.bf16.msra.mxu0 %v510
    %1374 = vmatprep.subr.bf16.mxu0 %v507
    %1375 = vmatpush1.bf16.msra.mxu0 %v506
    %1376 = vmatprep.subr.bf16.mxu0 %v503
    %1377 = vmatpush1.bf16.msra.mxu0 %v502
    %1378 = vmatprep.subr.bf16.mxu0 %v499
    %1379 = vmatpush1.bf16.msra.mxu0 %v498
    %1380 = vmatprep.subr.bf16.mxu0 0
    %1381 = vmatpush2.bf16.msra.mxu0 0
    %1382 = vmatprep.subr.bf16.mxu0 0
    %1383 = vmatpush2.bf16.msra.mxu0 0
    %1384 = vmatprep.subr.bf16.mxu0 0
    %1385 = vmatpush2.bf16.msra.mxu0 0
    %1386 = vmatprep.subr.bf16.mxu0 0
    %1387 = vmatpush2.bf16.msra.mxu0 0
    %1388 = vmatprep.subr.bf16.mxu0 0
    %1389 = vmatpush2.bf16.msra.mxu0 0
    %1390 = vmatprep.subr.bf16.mxu0 0
    %1391 = vmatpush2.bf16.msra.mxu0 0
    %1392 = vmatprep.subr.bf16.mxu0 0
    %1393 = vmatpush2.bf16.msra.mxu0 0
    %1394 = vmatprep.subr.bf16.mxu0 0
    %1395 = vmatpush2.bf16.msra.mxu0 0
    %1396 = vmatprep.mubr.bf16.mxu0 0
    %1397 = vmatmul.mubr.bf16.gmra.mxu0 %v1322
    %v1398 = vpop.f32.mrf.mxu0
    %v1399 = vadd.f32 0.0, %v1398
    %v1400 = vpop.f32.mrf.mxu0
    %v1401 = vadd.f32 0.0, %v1400
    %v1402 = vpop.f32.mrf.mxu0
    %v1403 = vpop.f32.mrf.mxu0
    %1404 = vdwg.mxu0
    %v1405 = vadd.f32 %v1318, %v1358
    %v1406 = vadd.f32 %v1319, %v1360
    %v1407 = vadd.f32 %v1320, %v1399
    %v1408 = vadd.f32 %v1321, %v1401
    %v1409 = vmul.f32 %v1405, 0.5
    %v1410 = vmul.f32 %v1406, 0.5
    %v1411 = vmul.f32 %v1407, 0.5
    %v1412 = vtanh.pop %v1409
    %v1413 = vtanh.pop %v1410
    %v1414 = vtanh.pop %v1411
    %v1415 = vmul.f32 %v1412, 0.5
    %v1416 = vmul.f32 %v1413, 0.5
    %v1417 = vmul.f32 %v1414, 0.5
    %v1418 = vadd.f32 %v1415, 0.5
    %v1419 = vadd.f32 %v1416, 0.5
    %v1420 = vadd.f32 %v1417, 0.5
    %v1421 = vtanh.pop %v1408
    %v1422 = vmul.f32 %v1419, %v1315
    %v1423 = vmul.f32 %v1418, %v1421
    %v1424 = vadd.f32 %v1422, %v1423
    %v1425 = vtanh.pop %v1424
    %v1426 = vmul.f32 %v1420, %v1425
    %v1427 = vld [vmem:[#allocation6] sm:$0xff]
    %v1428 = vld [vmem:[#allocation6 + $0x8] sm:$0xff]
    %v1429 = vld [vmem:[#allocation6 + $0x10] sm:$0xff]
    %v1430 = vld [vmem:[#allocation6 + $0x18] sm:$0xff]
    %v1431 = vld [vmem:[#allocation6 + $0x20] sm:$0xff]
    %v1432 = vld [vmem:[#allocation6 + $0x28] sm:$0xff]
    %v1433 = vld [vmem:[#allocation6 + $0x30] sm:$0xff]
    %v1434 = vld [vmem:[#allocation6 + $0x38] sm:$0xff]
    %v1435 = vld [vmem:[#allocation6 + $0x40] sm:$0xff]
    %v1436 = vld [vmem:[#allocation6 + $0x48] sm:$0xff]
    %v1437 = vld [vmem:[#allocation6 + $0x50] sm:$0xff]
    %v1438 = vld [vmem:[#allocation6 + $0x58] sm:$0xff]
    %v1439 = vld [vmem:[#allocation6 + $0x60] sm:$0xff]
    %v1440 = vld [vmem:[#allocation6 + $0x68] sm:$0xff]
    %v1441 = vld [vmem:[#allocation6 + $0x70] sm:$0xff]
    %v1442 = vld [vmem:[#allocation6 + $0x78] sm:$0xff]
    %v1443 = vld [vmem:[#allocation6 + $0x80] sm:$0x1]
    %v1444 = vld [vmem:[#allocation6 + $0x81] sm:$0x1]
    %v1445 = vld [vmem:[#allocation6 + $0x88] sm:$0xff]
    %v1446 = vld [vmem:[#allocation6 + $0x90] sm:$0xff]
    %v1447 = vld [vmem:[#allocation6 + $0x98] sm:$0xff]
    %v1448 = vld [vmem:[#allocation6 + $0xa0] sm:$0xff]
    %v1449 = vld [vmem:[#allocation6 + $0xa8] sm:$0xff]
    %v1450 = vld [vmem:[#allocation6 + $0xb0] sm:$0xff]
    %v1451 = vld [vmem:[#allocation6 + $0xb8] sm:$0xff]
    %v1452 = vld [vmem:[#allocation6 + $0xc0] sm:$0xff]
    %v1453 = vld [vmem:[#allocation6 + $0xc8] sm:$0xff]
    %v1454 = vld [vmem:[#allocation6 + $0xd0] sm:$0xff]
    %v1455 = vld [vmem:[#allocation6 + $0xd8] sm:$0xff]
    %v1456 = vld [vmem:[#allocation6 + $0xe0] sm:$0xff]
    %v1457 = vld [vmem:[#allocation6 + $0xe8] sm:$0xff]
    %v1458 = vld [vmem:[#allocation6 + $0xf0] sm:$0xff]
    %v1459 = vld [vmem:[#allocation6 + $0xf8] sm:$0xff]
    %v1460 = vld [vmem:[#allocation6 + $0x100] sm:$0xff]
    %v1461 = vlaneseq
    %v1462 = vshrl.u32 %v1461, 7
    %v1463 = vsub.s32 0, %v1462
    %v1464 = vrot.slane %v1443, %v1463
    %1465 = vmatprep.subr.mxu0 0.0
    %1466 = vmatpush1.msra.mxu0 %v1442
    %1467 = vmatprep.subr.mxu0 0.0
    %1468 = vmatpush1.msra.mxu0 %v1441
    %1469 = vmatprep.subr.mxu0 0.0
    %1470 = vmatpush1.msra.mxu0 %v1440
    %1471 = vmatprep.subr.mxu0 0.0
    %1472 = vmatpush1.msra.mxu0 %v1439
    %1473 = vmatprep.subr.mxu0 0.0
    %1474 = vmatpush1.msra.mxu0 %v1438
    %1475 = vmatprep.subr.mxu0 0.0
    %1476 = vmatpush1.msra.mxu0 %v1437
    %1477 = vmatprep.subr.mxu0 0.0
    %1478 = vmatpush1.msra.mxu0 %v1436
    %1479 = vmatprep.subr.mxu0 0.0
    %1480 = vmatpush1.msra.mxu0 %v1435
    %1481 = vmatprep.subr.mxu0 0.0
    %1482 = vmatpush1.msra.mxu0 %v1434
    %1483 = vmatprep.subr.mxu0 0.0
    %1484 = vmatpush1.msra.mxu0 %v1433
    %1485 = vmatprep.subr.mxu0 0.0
    %1486 = vmatpush1.msra.mxu0 %v1432
    %1487 = vmatprep.subr.mxu0 0.0
    %1488 = vmatpush1.msra.mxu0 %v1431
    %1489 = vmatprep.subr.mxu0 0.0
    %1490 = vmatpush1.msra.mxu0 %v1430
    %1491 = vmatprep.subr.mxu0 0.0
    %1492 = vmatpush1.msra.mxu0 %v1429
    %1493 = vmatprep.subr.mxu0 0.0
    %1494 = vmatpush1.msra.mxu0 %v1428
    %1495 = vmatprep.subr.mxu0 0.0
    %1496 = vmatpush1.msra.mxu0 %v1427
    %1497 = vmatprep.subr.mxu0 0.0
    %1498 = vmatpush2.msra.mxu0 0.0
    %1499 = vmatprep.subr.mxu0 0.0
    %1500 = vmatpush2.msra.mxu0 0.0
    %1501 = vmatprep.subr.mxu0 0.0
    %1502 = vmatpush2.msra.mxu0 0.0
    %1503 = vmatprep.subr.mxu0 0.0
    %1504 = vmatpush2.msra.mxu0 0.0
    %1505 = vmatprep.subr.mxu0 0.0
    %1506 = vmatpush2.msra.mxu0 0.0
    %1507 = vmatprep.subr.mxu0 0.0
    %1508 = vmatpush2.msra.mxu0 0.0
    %1509 = vmatprep.subr.mxu0 0.0
    %1510 = vmatpush2.msra.mxu0 0.0
    %1511 = vmatprep.subr.mxu0 0.0
    %1512 = vmatpush2.msra.mxu0 0.0
    %1513 = vmatprep.subr.mxu0 0.0
    %1514 = vmatpush2.msra.mxu0 0.0
    %1515 = vmatprep.subr.mxu0 0.0
    %1516 = vmatpush2.msra.mxu0 0.0
    %1517 = vmatprep.subr.mxu0 0.0
    %1518 = vmatpush2.msra.mxu0 0.0
    %1519 = vmatprep.subr.mxu0 0.0
    %1520 = vmatpush2.msra.mxu0 0.0
    %1521 = vmatprep.subr.mxu0 0.0
    %1522 = vmatpush2.msra.mxu0 0.0
    %1523 = vmatprep.subr.mxu0 0.0
    %1524 = vmatpush2.msra.mxu0 0.0
    %1525 = vmatprep.subr.mxu0 0.0
    %1526 = vmatpush2.msra.mxu0 0.0
    %1527 = vmatprep.subr.mxu0 0.0
    %1528 = vmatpush2.msra.mxu0 0.0
    %1529 = vmatprep.mubr.f32.mxu0 0.0
    %1530 = vmatmul.mubr.f32.gmra.mxu0 %v1426
    %v1531 = vpop.f32.mrf.mxu0
    %v1532 = vadd.f32 %v1464, %v1531
    %v1533 = vpop.f32.mrf.mxu0
    %1534 = vdwg.mxu0
    %vm1535 = vcmp.gt.f32.partialorder %v1532, 0.0
    %v1536 = vmul.f32 %v1532, 0.01
    %v1537 = vsel %vm1535, %v1532, %v1536
    %v1538 = vlaneseq
    %v1539 = vshrl.u32 %v1538, 7
    %v1540 = vsub.s32 0, %v1539
    %v1541 = vrot.slane %v1444, %v1540
    %1542 = vmatprep.subr.mxu0 0.0
    %1543 = vmatpush1.msra.mxu0 %v1460
    %1544 = vmatprep.subr.mxu0 0.0
    %1545 = vmatpush1.msra.mxu0 %v1459
    %1546 = vmatprep.subr.mxu0 0.0
    %1547 = vmatpush1.msra.mxu0 %v1458
    %1548 = vmatprep.subr.mxu0 0.0
    %1549 = vmatpush1.msra.mxu0 %v1457
    %1550 = vmatprep.subr.mxu0 0.0
    %1551 = vmatpush1.msra.mxu0 %v1456
    %1552 = vmatprep.subr.mxu0 0.0
    %1553 = vmatpush1.msra.mxu0 %v1455
    %1554 = vmatprep.subr.mxu0 0.0
    %1555 = vmatpush1.msra.mxu0 %v1454
    %1556 = vmatprep.subr.mxu0 0.0
    %1557 = vmatpush1.msra.mxu0 %v1453
    %1558 = vmatprep.subr.mxu0 0.0
    %1559 = vmatpush1.msra.mxu0 %v1452
    %1560 = vmatprep.subr.mxu0 0.0
    %1561 = vmatpush1.msra.mxu0 %v1451
    %1562 = vmatprep.subr.mxu0 0.0
    %1563 = vmatpush1.msra.mxu0 %v1450
    %1564 = vmatprep.subr.mxu0 0.0
    %1565 = vmatpush1.msra.mxu0 %v1449
    %1566 = vmatprep.subr.mxu0 0.0
    %1567 = vmatpush1.msra.mxu0 %v1448
    %1568 = vmatprep.subr.mxu0 0.0
    %1569 = vmatpush1.msra.mxu0 %v1447
    %1570 = vmatprep.subr.mxu0 0.0
    %1571 = vmatpush1.msra.mxu0 %v1446
    %1572 = vmatprep.subr.mxu0 0.0
    %1573 = vmatpush1.msra.mxu0 %v1445
    %1574 = vmatprep.subr.mxu0 0.0
    %1575 = vmatpush2.msra.mxu0 0.0
    %1576 = vmatprep.subr.mxu0 0.0
    %1577 = vmatpush2.msra.mxu0 0.0
    %1578 = vmatprep.subr.mxu0 0.0
    %1579 = vmatpush2.msra.mxu0 0.0
    %1580 = vmatprep.subr.mxu0 0.0
    %1581 = vmatpush2.msra.mxu0 0.0
    %1582 = vmatprep.subr.mxu0 0.0
    %1583 = vmatpush2.msra.mxu0 0.0
    %1584 = vmatprep.subr.mxu0 0.0
    %1585 = vmatpush2.msra.mxu0 0.0
    %1586 = vmatprep.subr.mxu0 0.0
    %1587 = vmatpush2.msra.mxu0 0.0
    %1588 = vmatprep.subr.mxu0 0.0
    %1589 = vmatpush2.msra.mxu0 0.0
    %1590 = vmatprep.subr.mxu0 0.0
    %1591 = vmatpush2.msra.mxu0 0.0
    %1592 = vmatprep.subr.mxu0 0.0
    %1593 = vmatpush2.msra.mxu0 0.0
    %1594 = vmatprep.subr.mxu0 0.0
    %1595 = vmatpush2.msra.mxu0 0.0
    %1596 = vmatprep.subr.mxu0 0.0
    %1597 = vmatpush2.msra.mxu0 0.0
    %1598 = vmatprep.subr.mxu0 0.0
    %1599 = vmatpush2.msra.mxu0 0.0
    %1600 = vmatprep.subr.mxu0 0.0
    %1601 = vmatpush2.msra.mxu0 0.0
    %1602 = vmatprep.subr.mxu0 0.0
    %1603 = vmatpush2.msra.mxu0 0.0
    %1604 = vmatprep.subr.mxu0 0.0
    %1605 = vmatpush2.msra.mxu0 0.0
    %1606 = vmatprep.mubr.f32.mxu0 0.0
    %1607 = vmatmul.mubr.f32.gmra.mxu0 %v1537
    %v1608 = vpop.f32.mrf.mxu0
    %v1609 = vadd.f32 %v1541, %v1608
    %v1610 = vpop.f32.mrf.mxu0
    %1611 = vdwg.mxu0
    %1612 = vst [vmem:[#allocation8] sm:$0xff] %v1609
    // Predicated region
    $region34: #{tpu_custom_call.1} parent=1 // pred_check
      _
    $region35: #{tpu_custom_call.1} parent=1 // pred_check_branch
      %1614 = sbr.rel (0) target = $region37
    $region36: #{tpu_custom_call.1} parent=1 // pred_region
      %s1616 = ssub.s32 128, 128
      %1617 = vsyncadd [#allocation5], %s1616
      %s1619 = sshll.u32 [#allocation8], 4
      %s1620 = int_to_ptr.vmem [resolvable:$true] %s1619
      %1622 = dma.vmem_to_hbm [thread:$0]  %s1620, 128, %s6, [#allocation5]
    $region37: #{tpu_custom_call.1} parent=1 // pred_fallthru
      _
    // Predicated region
    $region38: #{tpu_custom_call.1} parent=1 // pred_check
      _
    $region39: #{tpu_custom_call.1} parent=1 // pred_check_branch
      %1624 = sbr.rel (0) target = $region41
    $region40: #{tpu_custom_call.1} parent=1 // pred_region
      %1625 = dma.done [#allocation5], 128
    $region41: #{tpu_custom_call.1} parent=1 // pred_fallthru
      _
    %1626 = vsyncpa [#allocation4], 1
    %1627 = vsyncpa [#allocation7], 1
    %1628 = vsyncpa [#allocation5], 1

</llo_original>
